<compile_context>
chip_gen: v5e
topology: v5e:2x2
jax: 0.10.0
libtpu: 0.0.40
codegen_flags: <defaults>
</compile_context>

<pallas_src>
import numpy as np
import jax
import jax.numpy as jnp
from jax.experimental import pallas as pl
from jax.experimental.pallas import tpu as pltpu

_HIGH = jax.lax.Precision.HIGHEST  # only used by the pure-JAX reference


def _make_resblock_kernel(D, H, W, Cin, Cint, Cout, K, has_final):
    P = K // 2
    DHW = D * H * W
    HW = H * W

    def _mod(x, m):
        # cheap power-of-two path; general remainder otherwise
        if m & (m - 1) == 0:
            return jnp.bitwise_and(x, m - 1)
        return x % m

    def kernel(*refs):
        if has_final:
            (x_ref, w1_ref, b1_ref, w2_ref, b2_ref, w3_ref, b3_ref,
             wf_ref, bf_ref, o_ref, col_ref) = refs
        else:
            (x_ref, w1_ref, b1_ref, w2_ref, b2_ref, w3_ref, b3_ref,
             o_ref, col_ref) = refs

        x_cf = x_ref[0]                                        # (Cin, DHW) f32

        # conv1: 1x1x1 pointwise conv == channel matmul (bf16 in, f32 acc)
        h1 = jnp.dot(w1_ref[...], x_cf.astype(jnp.bfloat16),
                     preferred_element_type=jnp.float32) + b1_ref[...]   # (Cint, DHW)

        # --- im2col for conv2: K^3 lane-rolled, boundary-masked copies of h1
        #     stacked along the contraction (sublane) axis of the col scratch.
        lane = jax.lax.broadcasted_iota(jnp.int32, (1, DHW), 1)
        lane_hw = _mod(lane, HW)
        lane_w = _mod(lane, W)

        t = 0
        for kd in range(K):
            rd = kd - P
            for kh in range(K):
                rh = kh - P
                for kw in range(K):
                    rw = kw - P
                    off = rd * HW + rh * W + rw
                    if off == 0:
                        tap = h1
                    else:
                        tap = pltpu.roll(h1, (-off) % DHW, axis=1)
                    mask = None
                    if rd != 0:
                        lo, hi = max(0, -rd) * HW, min(D, D - rd) * HW
                        m = (lane >= lo) & (lane < hi)
                        mask = m if mask is None else (mask & m)
                    if rh != 0:
                        lo, hi = max(0, -rh) * W, min(H, H - rh) * W
                        m = (lane_hw >= lo) & (lane_hw < hi)
                        mask = m if mask is None else (mask & m)
                    if rw != 0:
                        lo, hi = max(0, -rw), min(W, W - rw)
                        m = (lane_w >= lo) & (lane_w < hi)
                        mask = m if mask is None else (mask & m)
                    if mask is not None:
                        tap = jnp.where(mask, tap, 0.0)
                    col_ref[t * Cint:(t + 1) * Cint, :] = tap
                    t += 1

        # conv2: KxKxK 'same' conv == ONE fused matmul, contraction = K^3*Cint
        col = col_ref[...].astype(jnp.bfloat16)                # (K^3*Cint, DHW)
        h2 = jnp.dot(w2_ref[...], col,
                     preferred_element_type=jnp.float32) + b2_ref[...]   # (Cint, DHW)

        # conv3: 1x1x1 back to in_channels, residual add in f32
        y = jnp.dot(w3_ref[...], h2.astype(jnp.bfloat16),
                    preferred_element_type=jnp.float32) + b3_ref[...]    # (Cin, DHW)
        y = y + x_cf

        if has_final:
            # final_op: 1x1x1 conv applied to (op(X) + X) when out_channels != in_channels
            y = jnp.dot(wf_ref[...], y.astype(jnp.bfloat16),
                        preferred_element_type=jnp.float32) + bf_ref[...]  # (Cout, DHW)

        o_ref[0] = y.astype(o_ref.dtype)                       # lane-dense store

    return kernel


def residual_block_3d(x_ncdhw, params, kernel_size):
    """params (kernel layout, channels-first, bf16 weights / f32 biases):
       w1 (Cint,Cin), b1 (Cint,1), w2 (Cint, K^3*Cint), b2 (Cint,1),
       w3 (Cin,Cint), b3 (Cin,1), optional wf (Cout,Cin), bf (Cout,1)."""
    N, Cin, D, H, W = x_ncdhw.shape
    K = kernel_size
    # torch padding='same' is asymmetric for even K; only odd K is supported here.
    assert K % 2 == 1, "only odd kernel_size is supported"
    Cint = params["w1"].shape[0]
    has_final = "wf" in params
    Cout = params["wf"].shape[0] if has_final else Cin
    DHW = D * H * W

    # channels-first + flattened spatial: pure reshape, no transpose / HBM round trip
    x_cf = x_ncdhw.reshape(N, Cin, DHW)

    kernel = _make_resblock_kernel(D, H, W, Cin, Cint, Cout, K, has_final)

    def full(a):
        r = a.ndim
        return pl.BlockSpec(a.shape, lambda n, _r=r: (0,) * _r)

    args = [x_cf, params["w1"], params["b1"], params["w2"], params["b2"],
            params["w3"], params["b3"]]
    in_specs = [pl.BlockSpec((1, Cin, DHW), lambda n: (n, 0, 0))]
    in_specs += [full(a) for a in args[1:]]
    if has_final:
        args += [params["wf"], params["bf"]]
        in_specs += [full(params["wf"]), full(params["bf"])]

    out = pl.pallas_call(
        kernel,
        out_shape=jax.ShapeDtypeStruct((N, Cout, DHW), x_ncdhw.dtype),
        grid_spec=pltpu.PrefetchScalarGridSpec(
            num_scalar_prefetch=0,
            grid=(N,),
            in_specs=in_specs,
            out_specs=pl.BlockSpec((1, Cout, DHW), lambda n: (n, 0, 0)),
            # im2col scratch; f32 to keep unaligned sublane-offset stores simple
            scratch_shapes=[pltpu.VMEM((K * K * K * Cint, DHW), jnp.float32)],
        ),
        compiler_params=pltpu.CompilerParams(
            dimension_semantics=("parallel",)),
    )(*args)

    return out.reshape(N, Cout, D, H, W)


# ---------------- deterministic parameter construction (torch-layout) ----------------

def make_torch_params(key, Cin, Cint, K, Cout=None):
    keys = jax.random.split(key, 8)

    def init(k, shape, fan_in):
        return jax.random.uniform(k, shape, jnp.float32, -1.0, 1.0) / np.sqrt(fan_in)

    t = {
        "w1": init(keys[0], (Cint, Cin, 1, 1, 1), Cin),             # Conv3d(in, inter, 1)
        "b1": init(keys[1], (Cint,), Cin),
        "w2": init(keys[2], (Cint, Cint, K, K, K), Cint * K ** 3),  # Conv3d(inter, inter, K, 'same')
        "b2": init(keys[3], (Cint,), Cint * K ** 3),
        "w3": init(keys[4], (Cin, Cint, 1, 1, 1), Cint),            # Conv3d(inter, in, 1)
        "b3": init(keys[5], (Cin,), Cint),
    }
    if Cout is not None and Cout != Cin:
        t["wf"] = init(keys[6], (Cout, Cin, 1, 1, 1), Cin)          # skip-projection conv
        t["bf"] = init(keys[7], (Cout,), Cin)
    return t


def to_kernel_params(t):
    """torch OIDHW -> kernel channels-first layout; weights bf16, biases f32 (C,1)."""
    Cint = t["w2"].shape[0]
    p = {
        "w1": t["w1"][:, :, 0, 0, 0].astype(jnp.bfloat16),                    # (Cint, Cin)
        "b1": t["b1"].reshape(-1, 1).astype(jnp.float32),
        # (O, I, kd, kh, kw) -> (O, kd, kh, kw, I) -> (O, K^3*I): row index
        # ((kd*K + kh)*K + kw)*Cint + ci matches the in-kernel col layout.
        "w2": jnp.transpose(t["w2"], (0, 2, 3, 4, 1)).reshape(Cint, -1)
                 .astype(jnp.bfloat16),
        "b2": t["b2"].reshape(-1, 1).astype(jnp.float32),
        "w3": t["w3"][:, :, 0, 0, 0].astype(jnp.bfloat16),                    # (Cin, Cint)
        "b3": t["b3"].reshape(-1, 1).astype(jnp.float32),
    }
    if "wf" in t:
        p["wf"] = t["wf"][:, :, 0, 0, 0].astype(jnp.bfloat16)                 # (Cout, Cin)
        p["bf"] = t["bf"].reshape(-1, 1).astype(jnp.float32)
    return p


# ---------------- pure-JAX reference (matches torch Conv3d semantics, f32) ----------------

def ref_forward(x, t, K):
    def conv(h, w, b, padding):
        y = jax.lax.conv_general_dilated(
            h, w, window_strides=(1, 1, 1), padding=padding,
            dimension_numbers=("NCDHW", "OIDHW", "NCDHW"), precision=_HIGH)
        return y + b.reshape(1, -1, 1, 1, 1)

    h = conv(x, t["w1"], t["b1"], "VALID")
    h = conv(h, t["w2"], t["b2"], "SAME")
    h = conv(h, t["w3"], t["b3"], "VALID")
    y = h + x                       # residual add
    if "wf" in t:                   # final_op (only when out_channels != in_channels)
        y = conv(y, t["wf"], t["bf"], "VALID")
    return y                        # adn_op = Identity


if __name__ == "__main__":
    key = jax.random.PRNGKey(0)
    kx, kp1, kp2 = jax.random.split(key, 3)

    N, Cin, D, H, W = 2, 4, 8, 8, 8
    K = 3
    x = jax.random.normal(kx, (N, Cin, D, H, W), jnp.float32)

    # Kernel matmuls run in bf16 (f32 accumulation); tolerance loosened accordingly.
    TOL = dict(rtol=2e-2, atol=2e-2)

    # Config 1: defaults -> inter=out=in, final_op/adn_op are Identity.
    t1 = make_torch_params(kp1, Cin, Cin, K)
    out1 = residual_block_3d(x, to_kernel_params(t1), K)
    jax.block_until_ready(out1)
    np.testing.assert_allclose(np.asarray(out1), np.asarray(ref_forward(x, t1, K)), **TOL)

    # Config 2: inter_channels=6, out_channels=8 -> skip-projection 1x1x1 conv active.
    t2 = make_torch_params(kp2, Cin, 6, K, Cout=8)
    out2 = residual_block_3d(x, to_kernel_params(t2), K)
    jax.block_until_ready(out2)
    np.testing.assert_allclose(np.asarray(out2), np.asarray(ref_forward(x, t2, K)), **TOL)

    print("KERNEL_OK")
</pallas_src>

<mosaic_0001>
module attributes {stable_mosaic.version = 11 : i64} {
  func.func @kernel(%arg0: i32, %arg1: memref<1x4x512xf32, #tpu.memory_space<vmem>>, %arg2: memref<4x4xbf16, #tpu.memory_space<vmem>>, %arg3: memref<4x1xf32, #tpu.memory_space<vmem>>, %arg4: memref<4x108xbf16, #tpu.memory_space<vmem>>, %arg5: memref<4x1xf32, #tpu.memory_space<vmem>>, %arg6: memref<4x4xbf16, #tpu.memory_space<vmem>>, %arg7: memref<4x1xf32, #tpu.memory_space<vmem>>, %arg8: memref<1x4x512xf32, #tpu.memory_space<vmem>>, %arg9: memref<108x512xf32, #tpu.memory_space<vmem>>) attributes {dimension_semantics = [#tpu.dimension_semantics<parallel>], iteration_bounds = array<i64: 2>, scalar_prefetch = 0 : i64, scratch_operands = 1 : i64, tpu.core_type = #tpu.core_type<tc>, window_params = [{transform_indices = @transform_0, window_bounds = array<i64: 1, 4, 512>}, {pipeline_mode = #tpu.pipeline_mode<synchronous>, transform_indices = @transform_1, window_bounds = array<i64: 4, 4>}, {pipeline_mode = #tpu.pipeline_mode<synchronous>, transform_indices = @transform_2, window_bounds = array<i64: 4, 1>}, {pipeline_mode = #tpu.pipeline_mode<synchronous>, transform_indices = @transform_3, window_bounds = array<i64: 4, 108>}, {pipeline_mode = #tpu.pipeline_mode<synchronous>, transform_indices = @transform_4, window_bounds = array<i64: 4, 1>}, {pipeline_mode = #tpu.pipeline_mode<synchronous>, transform_indices = @transform_5, window_bounds = array<i64: 4, 4>}, {pipeline_mode = #tpu.pipeline_mode<synchronous>, transform_indices = @transform_6, window_bounds = array<i64: 4, 1>}, {transform_indices = @transform_7, window_bounds = array<i64: 1, 4, 512>}]} {
    %c0 = arith.constant 0 : index
    %c0_0 = arith.constant 0 : index
    %c0_1 = arith.constant 0 : index
    %0 = vector.load %arg1[%c0, %c0_0, %c0_1] : memref<1x4x512xf32, #tpu.memory_space<vmem>>, vector<1x4x512xf32>
    %1 = vector.shape_cast %0 : vector<1x4x512xf32> to vector<4x512xf32>
    %c0_2 = arith.constant 0 : index
    %c0_3 = arith.constant 0 : index
    %2 = vector.load %arg2[%c0_2, %c0_3] : memref<4x4xbf16, #tpu.memory_space<vmem>>, vector<4x4xbf16>
    %3 = arith.truncf %1 : vector<4x512xf32> to vector<4x512xbf16>
    %cst = arith.constant dense<0.000000e+00> : vector<4x512xf32>
    %4 = tpu.matmul %2, %3, %cst {dimension_numbers = #tpu.dot_dimension_numbers<[1], [0], [0], [1], [0, 0, 1, 1], [], []>} : vector<4x4xbf16>, vector<4x512xbf16>, vector<4x512xf32> -> vector<4x512xf32>
    %c0_4 = arith.constant 0 : index
    %c0_5 = arith.constant 0 : index
    %5 = vector.load %arg3[%c0_4, %c0_5] : memref<4x1xf32, #tpu.memory_space<vmem>>, vector<4x1xf32>
    %6 = vector.broadcast %5 : vector<4x1xf32> to vector<4x512xf32>
    %7 = arith.addf %4, %6 : vector<4x512xf32>
    %8 = tpu.iota {dimensions = array<i32: 1>} : vector<1x512xi32>
    %c63_i32 = arith.constant 63 : i32
    %9 = vector.broadcast %c63_i32 : i32 to vector<1x512xi32>
    %10 = arith.andi %8, %9 : vector<1x512xi32>
    %c7_i32 = arith.constant 7 : i32
    %11 = vector.broadcast %c7_i32 : i32 to vector<1x512xi32>
    %12 = arith.andi %8, %11 : vector<1x512xi32>
    %c73_i32 = arith.constant 73 : i32
    %13 = tpu.dynamic_rotate %7 by %c73_i32 dim 1 : vector<4x512xf32>, i32 -> vector<4x512xf32>
    %c64_i32 = arith.constant 64 : i32
    %14 = vector.broadcast %c64_i32 : i32 to vector<1x512xi32>
    %15 = arith.cmpi sge, %8, %14 : vector<1x512xi32>
    %c512_i32 = arith.constant 512 : i32
    %16 = vector.broadcast %c512_i32 : i32 to vector<1x512xi32>
    %17 = arith.cmpi slt, %8, %16 : vector<1x512xi32>
    %18 = arith.andi %15, %17 : vector<1x512xi1>
    %c8_i32 = arith.constant 8 : i32
    %19 = vector.broadcast %c8_i32 : i32 to vector<1x512xi32>
    %20 = arith.cmpi sge, %10, %19 : vector<1x512xi32>
    %c64_i32_6 = arith.constant 64 : i32
    %21 = vector.broadcast %c64_i32_6 : i32 to vector<1x512xi32>
    %22 = arith.cmpi slt, %10, %21 : vector<1x512xi32>
    %23 = arith.andi %20, %22 : vector<1x512xi1>
    %24 = arith.andi %18, %23 : vector<1x512xi1>
    %c1_i32 = arith.constant 1 : i32
    %25 = vector.broadcast %c1_i32 : i32 to vector<1x512xi32>
    %26 = arith.cmpi sge, %12, %25 : vector<1x512xi32>
    %c8_i32_7 = arith.constant 8 : i32
    %27 = vector.broadcast %c8_i32_7 : i32 to vector<1x512xi32>
    %28 = arith.cmpi slt, %12, %27 : vector<1x512xi32>
    %29 = arith.andi %26, %28 : vector<1x512xi1>
    %30 = arith.andi %24, %29 : vector<1x512xi1>
    %cst_8 = arith.constant 0.000000e+00 : f32
    %31 = vector.shape_cast %30 : vector<1x512xi1> to vector<1x512xi1>
    %32 = vector.broadcast %31 : vector<1x512xi1> to vector<4x512xi1>
    %33 = vector.broadcast %cst_8 : f32 to vector<4x512xf32>
    %34 = arith.select %32, %13, %33 : vector<4x512xi1>, vector<4x512xf32>
    %c0_9 = arith.constant 0 : index
    %c0_10 = arith.constant 0 : index
    %35 = vector.load %arg9[%c0_9, %c0_10] : memref<108x512xf32, #tpu.memory_space<vmem>>, vector<4x512xf32>
    tpu.vector_store %arg9[%c0_9, %c0_10], %34 {strides = array<i32>} : memref<108x512xf32, #tpu.memory_space<vmem>>, vector<4x512xf32>,
    %c72_i32 = arith.constant 72 : i32
    %36 = tpu.dynamic_rotate %7 by %c72_i32 dim 1 : vector<4x512xf32>, i32 -> vector<4x512xf32>
    %c64_i32_11 = arith.constant 64 : i32
    %37 = vector.broadcast %c64_i32_11 : i32 to vector<1x512xi32>
    %38 = arith.cmpi sge, %8, %37 : vector<1x512xi32>
    %c512_i32_12 = arith.constant 512 : i32
    %39 = vector.broadcast %c512_i32_12 : i32 to vector<1x512xi32>
    %40 = arith.cmpi slt, %8, %39 : vector<1x512xi32>
    %41 = arith.andi %38, %40 : vector<1x512xi1>
    %c8_i32_13 = arith.constant 8 : i32
    %42 = vector.broadcast %c8_i32_13 : i32 to vector<1x512xi32>
    %43 = arith.cmpi sge, %10, %42 : vector<1x512xi32>
    %c64_i32_14 = arith.constant 64 : i32
    %44 = vector.broadcast %c64_i32_14 : i32 to vector<1x512xi32>
    %45 = arith.cmpi slt, %10, %44 : vector<1x512xi32>
    %46 = arith.andi %43, %45 : vector<1x512xi1>
    %47 = arith.andi %41, %46 : vector<1x512xi1>
    %cst_15 = arith.constant 0.000000e+00 : f32
    %48 = vector.shape_cast %47 : vector<1x512xi1> to vector<1x512xi1>
    %49 = vector.broadcast %48 : vector<1x512xi1> to vector<4x512xi1>
    %50 = vector.broadcast %cst_15 : f32 to vector<4x512xf32>
    %51 = arith.select %49, %36, %50 : vector<4x512xi1>, vector<4x512xf32>
    %c4 = arith.constant 4 : index
    %c0_16 = arith.constant 0 : index
    %52 = vector.load %arg9[%c4, %c0_16] : memref<108x512xf32, #tpu.memory_space<vmem>>, vector<4x512xf32>
    tpu.vector_store %arg9[%c4, %c0_16], %51 {strides = array<i32>} : memref<108x512xf32, #tpu.memory_space<vmem>>, vector<4x512xf32>,
    %c71_i32 = arith.constant 71 : i32
    %53 = tpu.dynamic_rotate %7 by %c71_i32 dim 1 : vector<4x512xf32>, i32 -> vector<4x512xf32>
    %c64_i32_17 = arith.constant 64 : i32
    %54 = vector.broadcast %c64_i32_17 : i32 to vector<1x512xi32>
    %55 = arith.cmpi sge, %8, %54 : vector<1x512xi32>
    %c512_i32_18 = arith.constant 512 : i32
    %56 = vector.broadcast %c512_i32_18 : i32 to vector<1x512xi32>
    %57 = arith.cmpi slt, %8, %56 : vector<1x512xi32>
    %58 = arith.andi %55, %57 : vector<1x512xi1>
    %c8_i32_19 = arith.constant 8 : i32
    %59 = vector.broadcast %c8_i32_19 : i32 to vector<1x512xi32>
    %60 = arith.cmpi sge, %10, %59 : vector<1x512xi32>
    %c64_i32_20 = arith.constant 64 : i32
    %61 = vector.broadcast %c64_i32_20 : i32 to vector<1x512xi32>
    %62 = arith.cmpi slt, %10, %61 : vector<1x512xi32>
    %63 = arith.andi %60, %62 : vector<1x512xi1>
    %64 = arith.andi %58, %63 : vector<1x512xi1>
    %c0_i32 = arith.constant 0 : i32
    %65 = vector.broadcast %c0_i32 : i32 to vector<1x512xi32>
    %66 = arith.cmpi sge, %12, %65 : vector<1x512xi32>
    %c7_i32_21 = arith.constant 7 : i32
    %67 = vector.broadcast %c7_i32_21 : i32 to vector<1x512xi32>
    %68 = arith.cmpi slt, %12, %67 : vector<1x512xi32>
    %69 = arith.andi %66, %68 : vector<1x512xi1>
    %70 = arith.andi %64, %69 : vector<1x512xi1>
    %cst_22 = arith.constant 0.000000e+00 : f32
    %71 = vector.shape_cast %70 : vector<1x512xi1> to vector<1x512xi1>
    %72 = vector.broadcast %71 : vector<1x512xi1> to vector<4x512xi1>
    %73 = vector.broadcast %cst_22 : f32 to vector<4x512xf32>
    %74 = arith.select %72, %53, %73 : vector<4x512xi1>, vector<4x512xf32>
    %c8 = arith.constant 8 : index
    %c0_23 = arith.constant 0 : index
    %75 = vector.load %arg9[%c8, %c0_23] : memref<108x512xf32, #tpu.memory_space<vmem>>, vector<4x512xf32>
    tpu.vector_store %arg9[%c8, %c0_23], %74 {strides = array<i32>} : memref<108x512xf32, #tpu.memory_space<vmem>>, vector<4x512xf32>,
    %c65_i32 = arith.constant 65 : i32
    %76 = tpu.dynamic_rotate %7 by %c65_i32 dim 1 : vector<4x512xf32>, i32 -> vector<4x512xf32>
    %c64_i32_24 = arith.constant 64 : i32
    %77 = vector.broadcast %c64_i32_24 : i32 to vector<1x512xi32>
    %78 = arith.cmpi sge, %8, %77 : vector<1x512xi32>
    %c512_i32_25 = arith.constant 512 : i32
    %79 = vector.broadcast %c512_i32_25 : i32 to vector<1x512xi32>
    %80 = arith.cmpi slt, %8, %79 : vector<1x512xi32>
    %81 = arith.andi %78, %80 : vector<1x512xi1>
    %c1_i32_26 = arith.constant 1 : i32
    %82 = vector.broadcast %c1_i32_26 : i32 to vector<1x512xi32>
    %83 = arith.cmpi sge, %12, %82 : vector<1x512xi32>
    %c8_i32_27 = arith.constant 8 : i32
    %84 = vector.broadcast %c8_i32_27 : i32 to vector<1x512xi32>
    %85 = arith.cmpi slt, %12, %84 : vector<1x512xi32>
    %86 = arith.andi %83, %85 : vector<1x512xi1>
    %87 = arith.andi %81, %86 : vector<1x512xi1>
    %cst_28 = arith.constant 0.000000e+00 : f32
    %88 = vector.shape_cast %87 : vector<1x512xi1> to vector<1x512xi1>
    %89 = vector.broadcast %88 : vector<1x512xi1> to vector<4x512xi1>
    %90 = vector.broadcast %cst_28 : f32 to vector<4x512xf32>
    %91 = arith.select %89, %76, %90 : vector<4x512xi1>, vector<4x512xf32>
    %c12 = arith.constant 12 : index
    %c0_29 = arith.constant 0 : index
    %92 = vector.load %arg9[%c12, %c0_29] : memref<108x512xf32, #tpu.memory_space<vmem>>, vector<4x512xf32>
    tpu.vector_store %arg9[%c12, %c0_29], %91 {strides = array<i32>} : memref<108x512xf32, #tpu.memory_space<vmem>>, vector<4x512xf32>,
    %c64_i32_30 = arith.constant 64 : i32
    %93 = tpu.dynamic_rotate %7 by %c64_i32_30 dim 1 : vector<4x512xf32>, i32 -> vector<4x512xf32>
    %c64_i32_31 = arith.constant 64 : i32
    %94 = vector.broadcast %c64_i32_31 : i32 to vector<1x512xi32>
    %95 = arith.cmpi sge, %8, %94 : vector<1x512xi32>
    %c512_i32_32 = arith.constant 512 : i32
    %96 = vector.broadcast %c512_i32_32 : i32 to vector<1x512xi32>
    %97 = arith.cmpi slt, %8, %96 : vector<1x512xi32>
    %98 = arith.andi %95, %97 : vector<1x512xi1>
    %cst_33 = arith.constant 0.000000e+00 : f32
    %99 = vector.shape_cast %98 : vector<1x512xi1> to vector<1x512xi1>
    %100 = vector.broadcast %99 : vector<1x512xi1> to vector<4x512xi1>
    %101 = vector.broadcast %cst_33 : f32 to vector<4x512xf32>
    %102 = arith.select %100, %93, %101 : vector<4x512xi1>, vector<4x512xf32>
    %c16 = arith.constant 16 : index
    %c0_34 = arith.constant 0 : index
    %103 = vector.load %arg9[%c16, %c0_34] : memref<108x512xf32, #tpu.memory_space<vmem>>, vector<4x512xf32>
    tpu.vector_store %arg9[%c16, %c0_34], %102 {strides = array<i32>} : memref<108x512xf32, #tpu.memory_space<vmem>>, vector<4x512xf32>,
    %c63_i32_35 = arith.constant 63 : i32
    %104 = tpu.dynamic_rotate %7 by %c63_i32_35 dim 1 : vector<4x512xf32>, i32 -> vector<4x512xf32>
    %c64_i32_36 = arith.constant 64 : i32
    %105 = vector.broadcast %c64_i32_36 : i32 to vector<1x512xi32>
    %106 = arith.cmpi sge, %8, %105 : vector<1x512xi32>
    %c512_i32_37 = arith.constant 512 : i32
    %107 = vector.broadcast %c512_i32_37 : i32 to vector<1x512xi32>
    %108 = arith.cmpi slt, %8, %107 : vector<1x512xi32>
    %109 = arith.andi %106, %108 : vector<1x512xi1>
    %c0_i32_38 = arith.constant 0 : i32
    %110 = vector.broadcast %c0_i32_38 : i32 to vector<1x512xi32>
    %111 = arith.cmpi sge, %12, %110 : vector<1x512xi32>
    %c7_i32_39 = arith.constant 7 : i32
    %112 = vector.broadcast %c7_i32_39 : i32 to vector<1x512xi32>
    %113 = arith.cmpi slt, %12, %112 : vector<1x512xi32>
    %114 = arith.andi %111, %113 : vector<1x512xi1>
    %115 = arith.andi %109, %114 : vector<1x512xi1>
    %cst_40 = arith.constant 0.000000e+00 : f32
    %116 = vector.shape_cast %115 : vector<1x512xi1> to vector<1x512xi1>
    %117 = vector.broadcast %116 : vector<1x512xi1> to vector<4x512xi1>
    %118 = vector.broadcast %cst_40 : f32 to vector<4x512xf32>
    %119 = arith.select %117, %104, %118 : vector<4x512xi1>, vector<4x512xf32>
    %c20 = arith.constant 20 : index
    %c0_41 = arith.constant 0 : index
    %120 = vector.load %arg9[%c20, %c0_41] : memref<108x512xf32, #tpu.memory_space<vmem>>, vector<4x512xf32>
    tpu.vector_store %arg9[%c20, %c0_41], %119 {strides = array<i32>} : memref<108x512xf32, #tpu.memory_space<vmem>>, vector<4x512xf32>,
    %c57_i32 = arith.constant 57 : i32
    %121 = tpu.dynamic_rotate %7 by %c57_i32 dim 1 : vector<4x512xf32>, i32 -> vector<4x512xf32>
    %c64_i32_42 = arith.constant 64 : i32
    %122 = vector.broadcast %c64_i32_42 : i32 to vector<1x512xi32>
    %123 = arith.cmpi sge, %8, %122 : vector<1x512xi32>
    %c512_i32_43 = arith.constant 512 : i32
    %124 = vector.broadcast %c512_i32_43 : i32 to vector<1x512xi32>
    %125 = arith.cmpi slt, %8, %124 : vector<1x512xi32>
    %126 = arith.andi %123, %125 : vector<1x512xi1>
    %c0_i32_44 = arith.constant 0 : i32
    %127 = vector.broadcast %c0_i32_44 : i32 to vector<1x512xi32>
    %128 = arith.cmpi sge, %10, %127 : vector<1x512xi32>
    %c56_i32 = arith.constant 56 : i32
    %129 = vector.broadcast %c56_i32 : i32 to vector<1x512xi32>
    %130 = arith.cmpi slt, %10, %129 : vector<1x512xi32>
    %131 = arith.andi %128, %130 : vector<1x512xi1>
    %132 = arith.andi %126, %131 : vector<1x512xi1>
    %c1_i32_45 = arith.constant 1 : i32
    %133 = vector.broadcast %c1_i32_45 : i32 to vector<1x512xi32>
    %134 = arith.cmpi sge, %12, %133 : vector<1x512xi32>
    %c8_i32_46 = arith.constant 8 : i32
    %135 = vector.broadcast %c8_i32_46 : i32 to vector<1x512xi32>
    %136 = arith.cmpi slt, %12, %135 : vector<1x512xi32>
    %137 = arith.andi %134, %136 : vector<1x512xi1>
    %138 = arith.andi %132, %137 : vector<1x512xi1>
    %cst_47 = arith.constant 0.000000e+00 : f32
    %139 = vector.shape_cast %138 : vector<1x512xi1> to vector<1x512xi1>
    %140 = vector.broadcast %139 : vector<1x512xi1> to vector<4x512xi1>
    %141 = vector.broadcast %cst_47 : f32 to vector<4x512xf32>
    %142 = arith.select %140, %121, %141 : vector<4x512xi1>, vector<4x512xf32>
    %c24 = arith.constant 24 : index
    %c0_48 = arith.constant 0 : index
    %143 = vector.load %arg9[%c24, %c0_48] : memref<108x512xf32, #tpu.memory_space<vmem>>, vector<4x512xf32>
    tpu.vector_store %arg9[%c24, %c0_48], %142 {strides = array<i32>} : memref<108x512xf32, #tpu.memory_space<vmem>>, vector<4x512xf32>,
    %c56_i32_49 = arith.constant 56 : i32
    %144 = tpu.dynamic_rotate %7 by %c56_i32_49 dim 1 : vector<4x512xf32>, i32 -> vector<4x512xf32>
    %c64_i32_50 = arith.constant 64 : i32
    %145 = vector.broadcast %c64_i32_50 : i32 to vector<1x512xi32>
    %146 = arith.cmpi sge, %8, %145 : vector<1x512xi32>
    %c512_i32_51 = arith.constant 512 : i32
    %147 = vector.broadcast %c512_i32_51 : i32 to vector<1x512xi32>
    %148 = arith.cmpi slt, %8, %147 : vector<1x512xi32>
    %149 = arith.andi %146, %148 : vector<1x512xi1>
    %c0_i32_52 = arith.constant 0 : i32
    %150 = vector.broadcast %c0_i32_52 : i32 to vector<1x512xi32>
    %151 = arith.cmpi sge, %10, %150 : vector<1x512xi32>
    %c56_i32_53 = arith.constant 56 : i32
    %152 = vector.broadcast %c56_i32_53 : i32 to vector<1x512xi32>
    %153 = arith.cmpi slt, %10, %152 : vector<1x512xi32>
    %154 = arith.andi %151, %153 : vector<1x512xi1>
    %155 = arith.andi %149, %154 : vector<1x512xi1>
    %cst_54 = arith.constant 0.000000e+00 : f32
    %156 = vector.shape_cast %155 : vector<1x512xi1> to vector<1x512xi1>
    %157 = vector.broadcast %156 : vector<1x512xi1> to vector<4x512xi1>
    %158 = vector.broadcast %cst_54 : f32 to vector<4x512xf32>
    %159 = arith.select %157, %144, %158 : vector<4x512xi1>, vector<4x512xf32>
    %c28 = arith.constant 28 : index
    %c0_55 = arith.constant 0 : index
    %160 = vector.load %arg9[%c28, %c0_55] : memref<108x512xf32, #tpu.memory_space<vmem>>, vector<4x512xf32>
    tpu.vector_store %arg9[%c28, %c0_55], %159 {strides = array<i32>} : memref<108x512xf32, #tpu.memory_space<vmem>>, vector<4x512xf32>,
    %c55_i32 = arith.constant 55 : i32
    %161 = tpu.dynamic_rotate %7 by %c55_i32 dim 1 : vector<4x512xf32>, i32 -> vector<4x512xf32>
    %c64_i32_56 = arith.constant 64 : i32
    %162 = vector.broadcast %c64_i32_56 : i32 to vector<1x512xi32>
    %163 = arith.cmpi sge, %8, %162 : vector<1x512xi32>
    %c512_i32_57 = arith.constant 512 : i32
    %164 = vector.broadcast %c512_i32_57 : i32 to vector<1x512xi32>
    %165 = arith.cmpi slt, %8, %164 : vector<1x512xi32>
    %166 = arith.andi %163, %165 : vector<1x512xi1>
    %c0_i32_58 = arith.constant 0 : i32
    %167 = vector.broadcast %c0_i32_58 : i32 to vector<1x512xi32>
    %168 = arith.cmpi sge, %10, %167 : vector<1x512xi32>
    %c56_i32_59 = arith.constant 56 : i32
    %169 = vector.broadcast %c56_i32_59 : i32 to vector<1x512xi32>
    %170 = arith.cmpi slt, %10, %169 : vector<1x512xi32>
    %171 = arith.andi %168, %170 : vector<1x512xi1>
    %172 = arith.andi %166, %171 : vector<1x512xi1>
    %c0_i32_60 = arith.constant 0 : i32
    %173 = vector.broadcast %c0_i32_60 : i32 to vector<1x512xi32>
    %174 = arith.cmpi sge, %12, %173 : vector<1x512xi32>
    %c7_i32_61 = arith.constant 7 : i32
    %175 = vector.broadcast %c7_i32_61 : i32 to vector<1x512xi32>
    %176 = arith.cmpi slt, %12, %175 : vector<1x512xi32>
    %177 = arith.andi %174, %176 : vector<1x512xi1>
    %178 = arith.andi %172, %177 : vector<1x512xi1>
    %cst_62 = arith.constant 0.000000e+00 : f32
    %179 = vector.shape_cast %178 : vector<1x512xi1> to vector<1x512xi1>
    %180 = vector.broadcast %179 : vector<1x512xi1> to vector<4x512xi1>
    %181 = vector.broadcast %cst_62 : f32 to vector<4x512xf32>
    %182 = arith.select %180, %161, %181 : vector<4x512xi1>, vector<4x512xf32>
    %c32 = arith.constant 32 : index
    %c0_63 = arith.constant 0 : index
    %183 = vector.load %arg9[%c32, %c0_63] : memref<108x512xf32, #tpu.memory_space<vmem>>, vector<4x512xf32>
    tpu.vector_store %arg9[%c32, %c0_63], %182 {strides = array<i32>} : memref<108x512xf32, #tpu.memory_space<vmem>>, vector<4x512xf32>,
    %c9_i32 = arith.constant 9 : i32
    %184 = tpu.dynamic_rotate %7 by %c9_i32 dim 1 : vector<4x512xf32>, i32 -> vector<4x512xf32>
    %c8_i32_64 = arith.constant 8 : i32
    %185 = vector.broadcast %c8_i32_64 : i32 to vector<1x512xi32>
    %186 = arith.cmpi sge, %10, %185 : vector<1x512xi32>
    %c64_i32_65 = arith.constant 64 : i32
    %187 = vector.broadcast %c64_i32_65 : i32 to vector<1x512xi32>
    %188 = arith.cmpi slt, %10, %187 : vector<1x512xi32>
    %189 = arith.andi %186, %188 : vector<1x512xi1>
    %c1_i32_66 = arith.constant 1 : i32
    %190 = vector.broadcast %c1_i32_66 : i32 to vector<1x512xi32>
    %191 = arith.cmpi sge, %12, %190 : vector<1x512xi32>
    %c8_i32_67 = arith.constant 8 : i32
    %192 = vector.broadcast %c8_i32_67 : i32 to vector<1x512xi32>
    %193 = arith.cmpi slt, %12, %192 : vector<1x512xi32>
    %194 = arith.andi %191, %193 : vector<1x512xi1>
    %195 = arith.andi %189, %194 : vector<1x512xi1>
    %cst_68 = arith.constant 0.000000e+00 : f32
    %196 = vector.shape_cast %195 : vector<1x512xi1> to vector<1x512xi1>
    %197 = vector.broadcast %196 : vector<1x512xi1> to vector<4x512xi1>
    %198 = vector.broadcast %cst_68 : f32 to vector<4x512xf32>
    %199 = arith.select %197, %184, %198 : vector<4x512xi1>, vector<4x512xf32>
    %c36 = arith.constant 36 : index
    %c0_69 = arith.constant 0 : index
    %200 = vector.load %arg9[%c36, %c0_69] : memref<108x512xf32, #tpu.memory_space<vmem>>, vector<4x512xf32>
    tpu.vector_store %arg9[%c36, %c0_69], %199 {strides = array<i32>} : memref<108x512xf32, #tpu.memory_space<vmem>>, vector<4x512xf32>,
    %c8_i32_70 = arith.constant 8 : i32
    %201 = tpu.dynamic_rotate %7 by %c8_i32_70 dim 1 : vector<4x512xf32>, i32 -> vector<4x512xf32>
    %c8_i32_71 = arith.constant 8 : i32
    %202 = vector.broadcast %c8_i32_71 : i32 to vector<1x512xi32>
    %203 = arith.cmpi sge, %10, %202 : vector<1x512xi32>
    %c64_i32_72 = arith.constant 64 : i32
    %204 = vector.broadcast %c64_i32_72 : i32 to vector<1x512xi32>
    %205 = arith.cmpi slt, %10, %204 : vector<1x512xi32>
    %206 = arith.andi %203, %205 : vector<1x512xi1>
    %cst_73 = arith.constant 0.000000e+00 : f32
    %207 = vector.shape_cast %206 : vector<1x512xi1> to vector<1x512xi1>
    %208 = vector.broadcast %207 : vector<1x512xi1> to vector<4x512xi1>
    %209 = vector.broadcast %cst_73 : f32 to vector<4x512xf32>
    %210 = arith.select %208, %201, %209 : vector<4x512xi1>, vector<4x512xf32>
    %c40 = arith.constant 40 : index
    %c0_74 = arith.constant 0 : index
    %211 = vector.load %arg9[%c40, %c0_74] : memref<108x512xf32, #tpu.memory_space<vmem>>, vector<4x512xf32>
    tpu.vector_store %arg9[%c40, %c0_74], %210 {strides = array<i32>} : memref<108x512xf32, #tpu.memory_space<vmem>>, vector<4x512xf32>,
    %c7_i32_75 = arith.constant 7 : i32
    %212 = tpu.dynamic_rotate %7 by %c7_i32_75 dim 1 : vector<4x512xf32>, i32 -> vector<4x512xf32>
    %c8_i32_76 = arith.constant 8 : i32
    %213 = vector.broadcast %c8_i32_76 : i32 to vector<1x512xi32>
    %214 = arith.cmpi sge, %10, %213 : vector<1x512xi32>
    %c64_i32_77 = arith.constant 64 : i32
    %215 = vector.broadcast %c64_i32_77 : i32 to vector<1x512xi32>
    %216 = arith.cmpi slt, %10, %215 : vector<1x512xi32>
    %217 = arith.andi %214, %216 : vector<1x512xi1>
    %c0_i32_78 = arith.constant 0 : i32
    %218 = vector.broadcast %c0_i32_78 : i32 to vector<1x512xi32>
    %219 = arith.cmpi sge, %12, %218 : vector<1x512xi32>
    %c7_i32_79 = arith.constant 7 : i32
    %220 = vector.broadcast %c7_i32_79 : i32 to vector<1x512xi32>
    %221 = arith.cmpi slt, %12, %220 : vector<1x512xi32>
    %222 = arith.andi %219, %221 : vector<1x512xi1>
    %223 = arith.andi %217, %222 : vector<1x512xi1>
    %cst_80 = arith.constant 0.000000e+00 : f32
    %224 = vector.shape_cast %223 : vector<1x512xi1> to vector<1x512xi1>
    %225 = vector.broadcast %224 : vector<1x512xi1> to vector<4x512xi1>
    %226 = vector.broadcast %cst_80 : f32 to vector<4x512xf32>
    %227 = arith.select %225, %212, %226 : vector<4x512xi1>, vector<4x512xf32>
    %c44 = arith.constant 44 : index
    %c0_81 = arith.constant 0 : index
    %228 = vector.load %arg9[%c44, %c0_81] : memref<108x512xf32, #tpu.memory_space<vmem>>, vector<4x512xf32>
    tpu.vector_store %arg9[%c44, %c0_81], %227 {strides = array<i32>} : memref<108x512xf32, #tpu.memory_space<vmem>>, vector<4x512xf32>,
    %c1_i32_82 = arith.constant 1 : i32
    %229 = tpu.dynamic_rotate %7 by %c1_i32_82 dim 1 : vector<4x512xf32>, i32 -> vector<4x512xf32>
    %c1_i32_83 = arith.constant 1 : i32
    %230 = vector.broadcast %c1_i32_83 : i32 to vector<1x512xi32>
    %231 = arith.cmpi sge, %12, %230 : vector<1x512xi32>
    %c8_i32_84 = arith.constant 8 : i32
    %232 = vector.broadcast %c8_i32_84 : i32 to vector<1x512xi32>
    %233 = arith.cmpi slt, %12, %232 : vector<1x512xi32>
    %234 = arith.andi %231, %233 : vector<1x512xi1>
    %cst_85 = arith.constant 0.000000e+00 : f32
    %235 = vector.shape_cast %234 : vector<1x512xi1> to vector<1x512xi1>
    %236 = vector.broadcast %235 : vector<1x512xi1> to vector<4x512xi1>
    %237 = vector.broadcast %cst_85 : f32 to vector<4x512xf32>
    %238 = arith.select %236, %229, %237 : vector<4x512xi1>, vector<4x512xf32>
    %c48 = arith.constant 48 : index
    %c0_86 = arith.constant 0 : index
    %239 = vector.load %arg9[%c48, %c0_86] : memref<108x512xf32, #tpu.memory_space<vmem>>, vector<4x512xf32>
    tpu.vector_store %arg9[%c48, %c0_86], %238 {strides = array<i32>} : memref<108x512xf32, #tpu.memory_space<vmem>>, vector<4x512xf32>,
    %c52 = arith.constant 52 : index
    %c0_87 = arith.constant 0 : index
    %240 = vector.load %arg9[%c52, %c0_87] : memref<108x512xf32, #tpu.memory_space<vmem>>, vector<4x512xf32>
    tpu.vector_store %arg9[%c52, %c0_87], %7 {strides = array<i32>} : memref<108x512xf32, #tpu.memory_space<vmem>>, vector<4x512xf32>,
    %c511_i32 = arith.constant 511 : i32
    %241 = tpu.dynamic_rotate %7 by %c511_i32 dim 1 : vector<4x512xf32>, i32 -> vector<4x512xf32>
    %c0_i32_88 = arith.constant 0 : i32
    %242 = vector.broadcast %c0_i32_88 : i32 to vector<1x512xi32>
    %243 = arith.cmpi sge, %12, %242 : vector<1x512xi32>
    %c7_i32_89 = arith.constant 7 : i32
    %244 = vector.broadcast %c7_i32_89 : i32 to vector<1x512xi32>
    %245 = arith.cmpi slt, %12, %244 : vector<1x512xi32>
    %246 = arith.andi %243, %245 : vector<1x512xi1>
    %cst_90 = arith.constant 0.000000e+00 : f32
    %247 = vector.shape_cast %246 : vector<1x512xi1> to vector<1x512xi1>
    %248 = vector.broadcast %247 : vector<1x512xi1> to vector<4x512xi1>
    %249 = vector.broadcast %cst_90 : f32 to vector<4x512xf32>
    %250 = arith.select %248, %241, %249 : vector<4x512xi1>, vector<4x512xf32>
    %c56 = arith.constant 56 : index
    %c0_91 = arith.constant 0 : index
    %251 = vector.load %arg9[%c56, %c0_91] : memref<108x512xf32, #tpu.memory_space<vmem>>, vector<4x512xf32>
    tpu.vector_store %arg9[%c56, %c0_91], %250 {strides = array<i32>} : memref<108x512xf32, #tpu.memory_space<vmem>>, vector<4x512xf32>,
    %c505_i32 = arith.constant 505 : i32
    %252 = tpu.dynamic_rotate %7 by %c505_i32 dim 1 : vector<4x512xf32>, i32 -> vector<4x512xf32>
    %c0_i32_92 = arith.constant 0 : i32
    %253 = vector.broadcast %c0_i32_92 : i32 to vector<1x512xi32>
    %254 = arith.cmpi sge, %10, %253 : vector<1x512xi32>
    %c56_i32_93 = arith.constant 56 : i32
    %255 = vector.broadcast %c56_i32_93 : i32 to vector<1x512xi32>
    %256 = arith.cmpi slt, %10, %255 : vector<1x512xi32>
    %257 = arith.andi %254, %256 : vector<1x512xi1>
    %c1_i32_94 = arith.constant 1 : i32
    %258 = vector.broadcast %c1_i32_94 : i32 to vector<1x512xi32>
    %259 = arith.cmpi sge, %12, %258 : vector<1x512xi32>
    %c8_i32_95 = arith.constant 8 : i32
    %260 = vector.broadcast %c8_i32_95 : i32 to vector<1x512xi32>
    %261 = arith.cmpi slt, %12, %260 : vector<1x512xi32>
    %262 = arith.andi %259, %261 : vector<1x512xi1>
    %263 = arith.andi %257, %262 : vector<1x512xi1>
    %cst_96 = arith.constant 0.000000e+00 : f32
    %264 = vector.shape_cast %263 : vector<1x512xi1> to vector<1x512xi1>
    %265 = vector.broadcast %264 : vector<1x512xi1> to vector<4x512xi1>
    %266 = vector.broadcast %cst_96 : f32 to vector<4x512xf32>
    %267 = arith.select %265, %252, %266 : vector<4x512xi1>, vector<4x512xf32>
    %c60 = arith.constant 60 : index
    %c0_97 = arith.constant 0 : index
    %268 = vector.load %arg9[%c60, %c0_97] : memref<108x512xf32, #tpu.memory_space<vmem>>, vector<4x512xf32>
    tpu.vector_store %arg9[%c60, %c0_97], %267 {strides = array<i32>} : memref<108x512xf32, #tpu.memory_space<vmem>>, vector<4x512xf32>,
    %c504_i32 = arith.constant 504 : i32
    %269 = tpu.dynamic_rotate %7 by %c504_i32 dim 1 : vector<4x512xf32>, i32 -> vector<4x512xf32>
    %c0_i32_98 = arith.constant 0 : i32
    %270 = vector.broadcast %c0_i32_98 : i32 to vector<1x512xi32>
    %271 = arith.cmpi sge, %10, %270 : vector<1x512xi32>
    %c56_i32_99 = arith.constant 56 : i32
    %272 = vector.broadcast %c56_i32_99 : i32 to vector<1x512xi32>
    %273 = arith.cmpi slt, %10, %272 : vector<1x512xi32>
    %274 = arith.andi %271, %273 : vector<1x512xi1>
    %cst_100 = arith.constant 0.000000e+00 : f32
    %275 = vector.shape_cast %274 : vector<1x512xi1> to vector<1x512xi1>
    %276 = vector.broadcast %275 : vector<1x512xi1> to vector<4x512xi1>
    %277 = vector.broadcast %cst_100 : f32 to vector<4x512xf32>
    %278 = arith.select %276, %269, %277 : vector<4x512xi1>, vector<4x512xf32>
    %c64 = arith.constant 64 : index
    %c0_101 = arith.constant 0 : index
    %279 = vector.load %arg9[%c64, %c0_101] : memref<108x512xf32, #tpu.memory_space<vmem>>, vector<4x512xf32>
    tpu.vector_store %arg9[%c64, %c0_101], %278 {strides = array<i32>} : memref<108x512xf32, #tpu.memory_space<vmem>>, vector<4x512xf32>,
    %c503_i32 = arith.constant 503 : i32
    %280 = tpu.dynamic_rotate %7 by %c503_i32 dim 1 : vector<4x512xf32>, i32 -> vector<4x512xf32>
    %c0_i32_102 = arith.constant 0 : i32
    %281 = vector.broadcast %c0_i32_102 : i32 to vector<1x512xi32>
    %282 = arith.cmpi sge, %10, %281 : vector<1x512xi32>
    %c56_i32_103 = arith.constant 56 : i32
    %283 = vector.broadcast %c56_i32_103 : i32 to vector<1x512xi32>
    %284 = arith.cmpi slt, %10, %283 : vector<1x512xi32>
    %285 = arith.andi %282, %284 : vector<1x512xi1>
    %c0_i32_104 = arith.constant 0 : i32
    %286 = vector.broadcast %c0_i32_104 : i32 to vector<1x512xi32>
    %287 = arith.cmpi sge, %12, %286 : vector<1x512xi32>
    %c7_i32_105 = arith.constant 7 : i32
    %288 = vector.broadcast %c7_i32_105 : i32 to vector<1x512xi32>
    %289 = arith.cmpi slt, %12, %288 : vector<1x512xi32>
    %290 = arith.andi %287, %289 : vector<1x512xi1>
    %291 = arith.andi %285, %290 : vector<1x512xi1>
    %cst_106 = arith.constant 0.000000e+00 : f32
    %292 = vector.shape_cast %291 : vector<1x512xi1> to vector<1x512xi1>
    %293 = vector.broadcast %292 : vector<1x512xi1> to vector<4x512xi1>
    %294 = vector.broadcast %cst_106 : f32 to vector<4x512xf32>
    %295 = arith.select %293, %280, %294 : vector<4x512xi1>, vector<4x512xf32>
    %c68 = arith.constant 68 : index
    %c0_107 = arith.constant 0 : index
    %296 = vector.load %arg9[%c68, %c0_107] : memref<108x512xf32, #tpu.memory_space<vmem>>, vector<4x512xf32>
    tpu.vector_store %arg9[%c68, %c0_107], %295 {strides = array<i32>} : memref<108x512xf32, #tpu.memory_space<vmem>>, vector<4x512xf32>,
    %c457_i32 = arith.constant 457 : i32
    %297 = tpu.dynamic_rotate %7 by %c457_i32 dim 1 : vector<4x512xf32>, i32 -> vector<4x512xf32>
    %c0_i32_108 = arith.constant 0 : i32
    %298 = vector.broadcast %c0_i32_108 : i32 to vector<1x512xi32>
    %299 = arith.cmpi sge, %8, %298 : vector<1x512xi32>
    %c448_i32 = arith.constant 448 : i32
    %300 = vector.broadcast %c448_i32 : i32 to vector<1x512xi32>
    %301 = arith.cmpi slt, %8, %300 : vector<1x512xi32>
    %302 = arith.andi %299, %301 : vector<1x512xi1>
    %c8_i32_109 = arith.constant 8 : i32
    %303 = vector.broadcast %c8_i32_109 : i32 to vector<1x512xi32>
    %304 = arith.cmpi sge, %10, %303 : vector<1x512xi32>
    %c64_i32_110 = arith.constant 64 : i32
    %305 = vector.broadcast %c64_i32_110 : i32 to vector<1x512xi32>
    %306 = arith.cmpi slt, %10, %305 : vector<1x512xi32>
    %307 = arith.andi %304, %306 : vector<1x512xi1>
    %308 = arith.andi %302, %307 : vector<1x512xi1>
    %c1_i32_111 = arith.constant 1 : i32
    %309 = vector.broadcast %c1_i32_111 : i32 to vector<1x512xi32>
    %310 = arith.cmpi sge, %12, %309 : vector<1x512xi32>
    %c8_i32_112 = arith.constant 8 : i32
    %311 = vector.broadcast %c8_i32_112 : i32 to vector<1x512xi32>
    %312 = arith.cmpi slt, %12, %311 : vector<1x512xi32>
    %313 = arith.andi %310, %312 : vector<1x512xi1>
    %314 = arith.andi %308, %313 : vector<1x512xi1>
    %cst_113 = arith.constant 0.000000e+00 : f32
    %315 = vector.shape_cast %314 : vector<1x512xi1> to vector<1x512xi1>
    %316 = vector.broadcast %315 : vector<1x512xi1> to vector<4x512xi1>
    %317 = vector.broadcast %cst_113 : f32 to vector<4x512xf32>
    %318 = arith.select %316, %297, %317 : vector<4x512xi1>, vector<4x512xf32>
    %c72 = arith.constant 72 : index
    %c0_114 = arith.constant 0 : index
    %319 = vector.load %arg9[%c72, %c0_114] : memref<108x512xf32, #tpu.memory_space<vmem>>, vector<4x512xf32>
    tpu.vector_store %arg9[%c72, %c0_114], %318 {strides = array<i32>} : memref<108x512xf32, #tpu.memory_space<vmem>>, vector<4x512xf32>,
    %c456_i32 = arith.constant 456 : i32
    %320 = tpu.dynamic_rotate %7 by %c456_i32 dim 1 : vector<4x512xf32>, i32 -> vector<4x512xf32>
    %c0_i32_115 = arith.constant 0 : i32
    %321 = vector.broadcast %c0_i32_115 : i32 to vector<1x512xi32>
    %322 = arith.cmpi sge, %8, %321 : vector<1x512xi32>
    %c448_i32_116 = arith.constant 448 : i32
    %323 = vector.broadcast %c448_i32_116 : i32 to vector<1x512xi32>
    %324 = arith.cmpi slt, %8, %323 : vector<1x512xi32>
    %325 = arith.andi %322, %324 : vector<1x512xi1>
    %c8_i32_117 = arith.constant 8 : i32
    %326 = vector.broadcast %c8_i32_117 : i32 to vector<1x512xi32>
    %327 = arith.cmpi sge, %10, %326 : vector<1x512xi32>
    %c64_i32_118 = arith.constant 64 : i32
    %328 = vector.broadcast %c64_i32_118 : i32 to vector<1x512xi32>
    %329 = arith.cmpi slt, %10, %328 : vector<1x512xi32>
    %330 = arith.andi %327, %329 : vector<1x512xi1>
    %331 = arith.andi %325, %330 : vector<1x512xi1>
    %cst_119 = arith.constant 0.000000e+00 : f32
    %332 = vector.shape_cast %331 : vector<1x512xi1> to vector<1x512xi1>
    %333 = vector.broadcast %332 : vector<1x512xi1> to vector<4x512xi1>
    %334 = vector.broadcast %cst_119 : f32 to vector<4x512xf32>
    %335 = arith.select %333, %320, %334 : vector<4x512xi1>, vector<4x512xf32>
    %c76 = arith.constant 76 : index
    %c0_120 = arith.constant 0 : index
    %336 = vector.load %arg9[%c76, %c0_120] : memref<108x512xf32, #tpu.memory_space<vmem>>, vector<4x512xf32>
    tpu.vector_store %arg9[%c76, %c0_120], %335 {strides = array<i32>} : memref<108x512xf32, #tpu.memory_space<vmem>>, vector<4x512xf32>,
    %c455_i32 = arith.constant 455 : i32
    %337 = tpu.dynamic_rotate %7 by %c455_i32 dim 1 : vector<4x512xf32>, i32 -> vector<4x512xf32>
    %c0_i32_121 = arith.constant 0 : i32
    %338 = vector.broadcast %c0_i32_121 : i32 to vector<1x512xi32>
    %339 = arith.cmpi sge, %8, %338 : vector<1x512xi32>
    %c448_i32_122 = arith.constant 448 : i32
    %340 = vector.broadcast %c448_i32_122 : i32 to vector<1x512xi32>
    %341 = arith.cmpi slt, %8, %340 : vector<1x512xi32>
    %342 = arith.andi %339, %341 : vector<1x512xi1>
    %c8_i32_123 = arith.constant 8 : i32
    %343 = vector.broadcast %c8_i32_123 : i32 to vector<1x512xi32>
    %344 = arith.cmpi sge, %10, %343 : vector<1x512xi32>
    %c64_i32_124 = arith.constant 64 : i32
    %345 = vector.broadcast %c64_i32_124 : i32 to vector<1x512xi32>
    %346 = arith.cmpi slt, %10, %345 : vector<1x512xi32>
    %347 = arith.andi %344, %346 : vector<1x512xi1>
    %348 = arith.andi %342, %347 : vector<1x512xi1>
    %c0_i32_125 = arith.constant 0 : i32
    %349 = vector.broadcast %c0_i32_125 : i32 to vector<1x512xi32>
    %350 = arith.cmpi sge, %12, %349 : vector<1x512xi32>
    %c7_i32_126 = arith.constant 7 : i32
    %351 = vector.broadcast %c7_i32_126 : i32 to vector<1x512xi32>
    %352 = arith.cmpi slt, %12, %351 : vector<1x512xi32>
    %353 = arith.andi %350, %352 : vector<1x512xi1>
    %354 = arith.andi %348, %353 : vector<1x512xi1>
    %cst_127 = arith.constant 0.000000e+00 : f32
    %355 = vector.shape_cast %354 : vector<1x512xi1> to vector<1x512xi1>
    %356 = vector.broadcast %355 : vector<1x512xi1> to vector<4x512xi1>
    %357 = vector.broadcast %cst_127 : f32 to vector<4x512xf32>
    %358 = arith.select %356, %337, %357 : vector<4x512xi1>, vector<4x512xf32>
    %c80 = arith.constant 80 : index
    %c0_128 = arith.constant 0 : index
    %359 = vector.load %arg9[%c80, %c0_128] : memref<108x512xf32, #tpu.memory_space<vmem>>, vector<4x512xf32>
    tpu.vector_store %arg9[%c80, %c0_128], %358 {strides = array<i32>} : memref<108x512xf32, #tpu.memory_space<vmem>>, vector<4x512xf32>,
    %c449_i32 = arith.constant 449 : i32
    %360 = tpu.dynamic_rotate %7 by %c449_i32 dim 1 : vector<4x512xf32>, i32 -> vector<4x512xf32>
    %c0_i32_129 = arith.constant 0 : i32
    %361 = vector.broadcast %c0_i32_129 : i32 to vector<1x512xi32>
    %362 = arith.cmpi sge, %8, %361 : vector<1x512xi32>
    %c448_i32_130 = arith.constant 448 : i32
    %363 = vector.broadcast %c448_i32_130 : i32 to vector<1x512xi32>
    %364 = arith.cmpi slt, %8, %363 : vector<1x512xi32>
    %365 = arith.andi %362, %364 : vector<1x512xi1>
    %c1_i32_131 = arith.constant 1 : i32
    %366 = vector.broadcast %c1_i32_131 : i32 to vector<1x512xi32>
    %367 = arith.cmpi sge, %12, %366 : vector<1x512xi32>
    %c8_i32_132 = arith.constant 8 : i32
    %368 = vector.broadcast %c8_i32_132 : i32 to vector<1x512xi32>
    %369 = arith.cmpi slt, %12, %368 : vector<1x512xi32>
    %370 = arith.andi %367, %369 : vector<1x512xi1>
    %371 = arith.andi %365, %370 : vector<1x512xi1>
    %cst_133 = arith.constant 0.000000e+00 : f32
    %372 = vector.shape_cast %371 : vector<1x512xi1> to vector<1x512xi1>
    %373 = vector.broadcast %372 : vector<1x512xi1> to vector<4x512xi1>
    %374 = vector.broadcast %cst_133 : f32 to vector<4x512xf32>
    %375 = arith.select %373, %360, %374 : vector<4x512xi1>, vector<4x512xf32>
    %c84 = arith.constant 84 : index
    %c0_134 = arith.constant 0 : index
    %376 = vector.load %arg9[%c84, %c0_134] : memref<108x512xf32, #tpu.memory_space<vmem>>, vector<4x512xf32>
    tpu.vector_store %arg9[%c84, %c0_134], %375 {strides = array<i32>} : memref<108x512xf32, #tpu.memory_space<vmem>>, vector<4x512xf32>,
    %c448_i32_135 = arith.constant 448 : i32
    %377 = tpu.dynamic_rotate %7 by %c448_i32_135 dim 1 : vector<4x512xf32>, i32 -> vector<4x512xf32>
    %c0_i32_136 = arith.constant 0 : i32
    %378 = vector.broadcast %c0_i32_136 : i32 to vector<1x512xi32>
    %379 = arith.cmpi sge, %8, %378 : vector<1x512xi32>
    %c448_i32_137 = arith.constant 448 : i32
    %380 = vector.broadcast %c448_i32_137 : i32 to vector<1x512xi32>
    %381 = arith.cmpi slt, %8, %380 : vector<1x512xi32>
    %382 = arith.andi %379, %381 : vector<1x512xi1>
    %cst_138 = arith.constant 0.000000e+00 : f32
    %383 = vector.shape_cast %382 : vector<1x512xi1> to vector<1x512xi1>
    %384 = vector.broadcast %383 : vector<1x512xi1> to vector<4x512xi1>
    %385 = vector.broadcast %cst_138 : f32 to vector<4x512xf32>
    %386 = arith.select %384, %377, %385 : vector<4x512xi1>, vector<4x512xf32>
    %c88 = arith.constant 88 : index
    %c0_139 = arith.constant 0 : index
    %387 = vector.load %arg9[%c88, %c0_139] : memref<108x512xf32, #tpu.memory_space<vmem>>, vector<4x512xf32>
    tpu.vector_store %arg9[%c88, %c0_139], %386 {strides = array<i32>} : memref<108x512xf32, #tpu.memory_space<vmem>>, vector<4x512xf32>,
    %c447_i32 = arith.constant 447 : i32
    %388 = tpu.dynamic_rotate %7 by %c447_i32 dim 1 : vector<4x512xf32>, i32 -> vector<4x512xf32>
    %c0_i32_140 = arith.constant 0 : i32
    %389 = vector.broadcast %c0_i32_140 : i32 to vector<1x512xi32>
    %390 = arith.cmpi sge, %8, %389 : vector<1x512xi32>
    %c448_i32_141 = arith.constant 448 : i32
    %391 = vector.broadcast %c448_i32_141 : i32 to vector<1x512xi32>
    %392 = arith.cmpi slt, %8, %391 : vector<1x512xi32>
    %393 = arith.andi %390, %392 : vector<1x512xi1>
    %c0_i32_142 = arith.constant 0 : i32
    %394 = vector.broadcast %c0_i32_142 : i32 to vector<1x512xi32>
    %395 = arith.cmpi sge, %12, %394 : vector<1x512xi32>
    %c7_i32_143 = arith.constant 7 : i32
    %396 = vector.broadcast %c7_i32_143 : i32 to vector<1x512xi32>
    %397 = arith.cmpi slt, %12, %396 : vector<1x512xi32>
    %398 = arith.andi %395, %397 : vector<1x512xi1>
    %399 = arith.andi %393, %398 : vector<1x512xi1>
    %cst_144 = arith.constant 0.000000e+00 : f32
    %400 = vector.shape_cast %399 : vector<1x512xi1> to vector<1x512xi1>
    %401 = vector.broadcast %400 : vector<1x512xi1> to vector<4x512xi1>
    %402 = vector.broadcast %cst_144 : f32 to vector<4x512xf32>
    %403 = arith.select %401, %388, %402 : vector<4x512xi1>, vector<4x512xf32>
    %c92 = arith.constant 92 : index
    %c0_145 = arith.constant 0 : index
    %404 = vector.load %arg9[%c92, %c0_145] : memref<108x512xf32, #tpu.memory_space<vmem>>, vector<4x512xf32>
    tpu.vector_store %arg9[%c92, %c0_145], %403 {strides = array<i32>} : memref<108x512xf32, #tpu.memory_space<vmem>>, vector<4x512xf32>,
    %c441_i32 = arith.constant 441 : i32
    %405 = tpu.dynamic_rotate %7 by %c441_i32 dim 1 : vector<4x512xf32>, i32 -> vector<4x512xf32>
    %c0_i32_146 = arith.constant 0 : i32
    %406 = vector.broadcast %c0_i32_146 : i32 to vector<1x512xi32>
    %407 = arith.cmpi sge, %8, %406 : vector<1x512xi32>
    %c448_i32_147 = arith.constant 448 : i32
    %408 = vector.broadcast %c448_i32_147 : i32 to vector<1x512xi32>
    %409 = arith.cmpi slt, %8, %408 : vector<1x512xi32>
    %410 = arith.andi %407, %409 : vector<1x512xi1>
    %c0_i32_148 = arith.constant 0 : i32
    %411 = vector.broadcast %c0_i32_148 : i32 to vector<1x512xi32>
    %412 = arith.cmpi sge, %10, %411 : vector<1x512xi32>
    %c56_i32_149 = arith.constant 56 : i32
    %413 = vector.broadcast %c56_i32_149 : i32 to vector<1x512xi32>
    %414 = arith.cmpi slt, %10, %413 : vector<1x512xi32>
    %415 = arith.andi %412, %414 : vector<1x512xi1>
    %416 = arith.andi %410, %415 : vector<1x512xi1>
    %c1_i32_150 = arith.constant 1 : i32
    %417 = vector.broadcast %c1_i32_150 : i32 to vector<1x512xi32>
    %418 = arith.cmpi sge, %12, %417 : vector<1x512xi32>
    %c8_i32_151 = arith.constant 8 : i32
    %419 = vector.broadcast %c8_i32_151 : i32 to vector<1x512xi32>
    %420 = arith.cmpi slt, %12, %419 : vector<1x512xi32>
    %421 = arith.andi %418, %420 : vector<1x512xi1>
    %422 = arith.andi %416, %421 : vector<1x512xi1>
    %cst_152 = arith.constant 0.000000e+00 : f32
    %423 = vector.shape_cast %422 : vector<1x512xi1> to vector<1x512xi1>
    %424 = vector.broadcast %423 : vector<1x512xi1> to vector<4x512xi1>
    %425 = vector.broadcast %cst_152 : f32 to vector<4x512xf32>
    %426 = arith.select %424, %405, %425 : vector<4x512xi1>, vector<4x512xf32>
    %c96 = arith.constant 96 : index
    %c0_153 = arith.constant 0 : index
    %427 = vector.load %arg9[%c96, %c0_153] : memref<108x512xf32, #tpu.memory_space<vmem>>, vector<4x512xf32>
    tpu.vector_store %arg9[%c96, %c0_153], %426 {strides = array<i32>} : memref<108x512xf32, #tpu.memory_space<vmem>>, vector<4x512xf32>,
    %c440_i32 = arith.constant 440 : i32
    %428 = tpu.dynamic_rotate %7 by %c440_i32 dim 1 : vector<4x512xf32>, i32 -> vector<4x512xf32>
    %c0_i32_154 = arith.constant 0 : i32
    %429 = vector.broadcast %c0_i32_154 : i32 to vector<1x512xi32>
    %430 = arith.cmpi sge, %8, %429 : vector<1x512xi32>
    %c448_i32_155 = arith.constant 448 : i32
    %431 = vector.broadcast %c448_i32_155 : i32 to vector<1x512xi32>
    %432 = arith.cmpi slt, %8, %431 : vector<1x512xi32>
    %433 = arith.andi %430, %432 : vector<1x512xi1>
    %c0_i32_156 = arith.constant 0 : i32
    %434 = vector.broadcast %c0_i32_156 : i32 to vector<1x512xi32>
    %435 = arith.cmpi sge, %10, %434 : vector<1x512xi32>
    %c56_i32_157 = arith.constant 56 : i32
    %436 = vector.broadcast %c56_i32_157 : i32 to vector<1x512xi32>
    %437 = arith.cmpi slt, %10, %436 : vector<1x512xi32>
    %438 = arith.andi %435, %437 : vector<1x512xi1>
    %439 = arith.andi %433, %438 : vector<1x512xi1>
    %cst_158 = arith.constant 0.000000e+00 : f32
    %440 = vector.shape_cast %439 : vector<1x512xi1> to vector<1x512xi1>
    %441 = vector.broadcast %440 : vector<1x512xi1> to vector<4x512xi1>
    %442 = vector.broadcast %cst_158 : f32 to vector<4x512xf32>
    %443 = arith.select %441, %428, %442 : vector<4x512xi1>, vector<4x512xf32>
    %c100 = arith.constant 100 : index
    %c0_159 = arith.constant 0 : index
    %444 = vector.load %arg9[%c100, %c0_159] : memref<108x512xf32, #tpu.memory_space<vmem>>, vector<4x512xf32>
    tpu.vector_store %arg9[%c100, %c0_159], %443 {strides = array<i32>} : memref<108x512xf32, #tpu.memory_space<vmem>>, vector<4x512xf32>,
    %c439_i32 = arith.constant 439 : i32
    %445 = tpu.dynamic_rotate %7 by %c439_i32 dim 1 : vector<4x512xf32>, i32 -> vector<4x512xf32>
    %c0_i32_160 = arith.constant 0 : i32
    %446 = vector.broadcast %c0_i32_160 : i32 to vector<1x512xi32>
    %447 = arith.cmpi sge, %8, %446 : vector<1x512xi32>
    %c448_i32_161 = arith.constant 448 : i32
    %448 = vector.broadcast %c448_i32_161 : i32 to vector<1x512xi32>
    %449 = arith.cmpi slt, %8, %448 : vector<1x512xi32>
    %450 = arith.andi %447, %449 : vector<1x512xi1>
    %c0_i32_162 = arith.constant 0 : i32
    %451 = vector.broadcast %c0_i32_162 : i32 to vector<1x512xi32>
    %452 = arith.cmpi sge, %10, %451 : vector<1x512xi32>
    %c56_i32_163 = arith.constant 56 : i32
    %453 = vector.broadcast %c56_i32_163 : i32 to vector<1x512xi32>
    %454 = arith.cmpi slt, %10, %453 : vector<1x512xi32>
    %455 = arith.andi %452, %454 : vector<1x512xi1>
    %456 = arith.andi %450, %455 : vector<1x512xi1>
    %c0_i32_164 = arith.constant 0 : i32
    %457 = vector.broadcast %c0_i32_164 : i32 to vector<1x512xi32>
    %458 = arith.cmpi sge, %12, %457 : vector<1x512xi32>
    %c7_i32_165 = arith.constant 7 : i32
    %459 = vector.broadcast %c7_i32_165 : i32 to vector<1x512xi32>
    %460 = arith.cmpi slt, %12, %459 : vector<1x512xi32>
    %461 = arith.andi %458, %460 : vector<1x512xi1>
    %462 = arith.andi %456, %461 : vector<1x512xi1>
    %cst_166 = arith.constant 0.000000e+00 : f32
    %463 = vector.shape_cast %462 : vector<1x512xi1> to vector<1x512xi1>
    %464 = vector.broadcast %463 : vector<1x512xi1> to vector<4x512xi1>
    %465 = vector.broadcast %cst_166 : f32 to vector<4x512xf32>
    %466 = arith.select %464, %445, %465 : vector<4x512xi1>, vector<4x512xf32>
    %c104 = arith.constant 104 : index
    %c0_167 = arith.constant 0 : index
    %467 = vector.load %arg9[%c104, %c0_167] : memref<108x512xf32, #tpu.memory_space<vmem>>, vector<4x512xf32>
    tpu.vector_store %arg9[%c104, %c0_167], %466 {strides = array<i32>} : memref<108x512xf32, #tpu.memory_space<vmem>>, vector<4x512xf32>,
    %c0_168 = arith.constant 0 : index
    %c0_169 = arith.constant 0 : index
    %468 = vector.load %arg9[%c0_168, %c0_169] : memref<108x512xf32, #tpu.memory_space<vmem>>, vector<108x512xf32>
    %469 = arith.truncf %468 : vector<108x512xf32> to vector<108x512xbf16>
    %c0_170 = arith.constant 0 : index
    %c0_171 = arith.constant 0 : index
    %470 = vector.load %arg4[%c0_170, %c0_171] : memref<4x108xbf16, #tpu.memory_space<vmem>>, vector<4x108xbf16>
    %cst_172 = arith.constant dense<0.000000e+00> : vector<4x512xf32>
    %471 = tpu.matmul %470, %469, %cst_172 {dimension_numbers = #tpu.dot_dimension_numbers<[1], [0], [0], [1], [0, 0, 1, 1], [], []>} : vector<4x108xbf16>, vector<108x512xbf16>, vector<4x512xf32> -> vector<4x512xf32>
    %c0_173 = arith.constant 0 : index
    %c0_174 = arith.constant 0 : index
    %472 = vector.load %arg5[%c0_173, %c0_174] : memref<4x1xf32, #tpu.memory_space<vmem>>, vector<4x1xf32>
    %473 = vector.broadcast %472 : vector<4x1xf32> to vector<4x512xf32>
    %474 = arith.addf %471, %473 : vector<4x512xf32>
    %c0_175 = arith.constant 0 : index
    %c0_176 = arith.constant 0 : index
    %475 = vector.load %arg6[%c0_175, %c0_176] : memref<4x4xbf16, #tpu.memory_space<vmem>>, vector<4x4xbf16>
    %476 = arith.truncf %474 : vector<4x512xf32> to vector<4x512xbf16>
    %cst_177 = arith.constant dense<0.000000e+00> : vector<4x512xf32>
    %477 = tpu.matmul %475, %476, %cst_177 {dimension_numbers = #tpu.dot_dimension_numbers<[1], [0], [0], [1], [0, 0, 1, 1], [], []>} : vector<4x4xbf16>, vector<4x512xbf16>, vector<4x512xf32> -> vector<4x512xf32>
    %c0_178 = arith.constant 0 : index
    %c0_179 = arith.constant 0 : index
    %478 = vector.load %arg7[%c0_178, %c0_179] : memref<4x1xf32, #tpu.memory_space<vmem>>, vector<4x1xf32>
    %479 = vector.broadcast %478 : vector<4x1xf32> to vector<4x512xf32>
    %480 = arith.addf %477, %479 : vector<4x512xf32>
    %481 = arith.addf %480, %1 : vector<4x512xf32>
    %c0_180 = arith.constant 0 : index
    %c0_181 = arith.constant 0 : index
    %c0_182 = arith.constant 0 : index
    %482 = vector.load %arg8[%c0_180, %c0_181, %c0_182] : memref<1x4x512xf32, #tpu.memory_space<vmem>>, vector<1x4x512xf32>
    %483 = vector.shape_cast %482 : vector<1x4x512xf32> to vector<4x512xf32>
    %484 = vector.shape_cast %481 : vector<4x512xf32> to vector<1x4x512xf32>
    tpu.vector_store %arg8[%c0_180, %c0_181, %c0_182], %484 {strides = array<i32>} : memref<1x4x512xf32, #tpu.memory_space<vmem>>, vector<1x4x512xf32>,
    return
  }
  func.func @transform_0(%arg0: i32) -> (i32, i32, i32) {
    %c0_i32 = arith.constant 0 : i32
    %c0_i32_0 = arith.constant 0 : i32
    %c0_i32_1 = arith.constant 0 : i32
    return %arg0, %c0_i32, %c0_i32_0 : i32, i32, i32
  }
  func.func @transform_1(%arg0: i32) -> (i32, i32) {
    %c0_i32 = arith.constant 0 : i32
    %c0_i32_0 = arith.constant 0 : i32
    %c0_i32_1 = arith.constant 0 : i32
    return %c0_i32, %c0_i32_0 : i32, i32
  }
  func.func @transform_2(%arg0: i32) -> (i32, i32) {
    %c0_i32 = arith.constant 0 : i32
    %c0_i32_0 = arith.constant 0 : i32
    %c0_i32_1 = arith.constant 0 : i32
    return %c0_i32, %c0_i32_0 : i32, i32
  }
  func.func @transform_3(%arg0: i32) -> (i32, i32) {
    %c0_i32 = arith.constant 0 : i32
    %c0_i32_0 = arith.constant 0 : i32
    %c0_i32_1 = arith.constant 0 : i32
    return %c0_i32, %c0_i32_0 : i32, i32
  }
  func.func @transform_4(%arg0: i32) -> (i32, i32) {
    %c0_i32 = arith.constant 0 : i32
    %c0_i32_0 = arith.constant 0 : i32
    %c0_i32_1 = arith.constant 0 : i32
    return %c0_i32, %c0_i32_0 : i32, i32
  }
  func.func @transform_5(%arg0: i32) -> (i32, i32) {
    %c0_i32 = arith.constant 0 : i32
    %c0_i32_0 = arith.constant 0 : i32
    %c0_i32_1 = arith.constant 0 : i32
    return %c0_i32, %c0_i32_0 : i32, i32
  }
  func.func @transform_6(%arg0: i32) -> (i32, i32) {
    %c0_i32 = arith.constant 0 : i32
    %c0_i32_0 = arith.constant 0 : i32
    %c0_i32_1 = arith.constant 0 : i32
    return %c0_i32, %c0_i32_0 : i32, i32
  }
  func.func @transform_7(%arg0: i32) -> (i32, i32, i32) {
    %c0_i32 = arith.constant 0 : i32
    %c0_i32_0 = arith.constant 0 : i32
    %c0_i32_1 = arith.constant 0 : i32
    return %arg0, %c0_i32, %c0_i32_0 : i32, i32, i32
  }
}

</mosaic_0001>

<llo_original>
// kernel: tpu_custom_call.1
$region0: #{tpu_custom_call.1}
  #allocation0 [shape = 'u32[]', space=smem, size = 0x4, offset = 0x4, fixed_abs, tag = 'smem constant byte address 0x4 - core index']
  #allocation1 [shape = 'u32[72,128]{1,0:T(1,128)}', space=vmem, size = 0x9000, scoped, tag = 'internal scratch']
  #allocation2 [shape = 'f32[108,512]{1,0:T(8,128)}', space=vmem, size = 0x38000, scoped, tag = 'scratch operand']
  %s0 = inlined_call_operand.hbm [shape: f32[2,4,512], index: 0, kind: input, shape index: {}]
  %s1 = inlined_call_operand.vmem [shape: bf16[4,4], index: 1, kind: input, shape index: {}]
  %s2 = inlined_call_operand.vmem [shape: f32[4,1], index: 2, kind: input, shape index: {}]
  %s3 = inlined_call_operand.vmem [shape: bf16[4,108], index: 3, kind: input, shape index: {}]
  %s4 = inlined_call_operand.vmem [shape: f32[4,1], index: 4, kind: input, shape index: {}]
  %s5 = inlined_call_operand.vmem [shape: bf16[4,4], index: 5, kind: input, shape index: {}]
  %s6 = inlined_call_operand.vmem [shape: f32[4,1], index: 6, kind: input, shape index: {}]
  %s7 = inlined_call_operand.hbm [shape: f32[2,4,512], index: 7, kind: output, shape index: {}]
  %s8 = sld [smem:[#allocation0]]
  $region65: #{tpu_custom_call.1} parent=0
    _
  %s10 = ssub.s32 1, %s8
  %s11 = scalar_select 0, %s10, %s8
  $region1: #{tpu_custom_call.1} parent=0
    #allocation3 [shape = 'u8[16384]{0}', space=vmem, size = 0x4000, scoped, tag = 'input window, operand 0']
    #allocation4 [shape = 's32[2]{0}', space=sflag, size = 0x8, scoped, tag = 'scoped memory for tpu_custom_call.1']
    #allocation5 [shape = 's32[2]{0}', space=sflag, size = 0x8, scoped, tag = 'scoped memory for tpu_custom_call.1']
    #allocation6 [shape = 'u8[16384]{0}', space=vmem, size = 0x4000, scoped, tag = 'output window, operand 0']
    %12 = vsyncpa [#allocation4], 0
    %s13 = scalar_lea.sflag [#allocation4], 1
    %14 = vsyncpa %s13, 0
    %15 = vsyncpa [#allocation5], 0
    %s16 = scalar_lea.sflag [#allocation5], 1
    %17 = vsyncpa %s16, 0
    loop: start=0, step=1, limit=4
    $region2: #{tpu_custom_call.1} parent=1 // loop_pre_header
      _
    $region3: #{tpu_custom_call.1} parent=1 // loop_header
      %s19 = sphi 0, %s23
      %p20 = scmp.ge.s32.totalorder %s19, 4
      %s29 = sphi 0, %s31
      %s32 = sphi 0, %s29
      %s33 = sphi 0, %s32
      %s49 = sphi 0, %s33
      %s53 = sphi 0, %s53
      %s55 = sphi 0, %s53
      %s56 = sphi 0, %s55
      %s70 = sphi 0, %s56
      %s74 = sphi 0, %s74
      %s76 = sphi 0, %s74
      %s77 = sphi 0, %s76
      %s91 = sphi 0, %s77
      %s95 = sphi 0, %s95
      %s97 = sphi 0, %s95
      %s98 = sphi 0, %s97
      %s112 = sphi 0, %s98
      %s116 = sphi 0, %s116
      %s118 = sphi 0, %s116
      %s119 = sphi 0, %s118
      %s133 = sphi 0, %s119
      %s137 = sphi 0, %s137
      %s139 = sphi 0, %s137
      %s140 = sphi 0, %s139
      %s154 = sphi 0, %s140
      %s158 = sphi 0, %s158
      %s160 = sphi 0, %s158
      %s161 = sphi 0, %s160
      %s175 = sphi 0, %s161
      %s181 = sphi 0, %s183
      %s184 = sphi 0, %s181
      %s185 = sphi 0, %s184
      %s201 = sphi 0, %s185
    $region4: #{tpu_custom_call.1} parent=1 // loop_header_branch
      %22 = sbr.rel (%p20) target = $region8
    $region5: #{tpu_custom_call.1} parent=1 // loop_body
      %s24 = ssub.s32 %s19, 1
      %s25 = ssub.s32 %s19, 2
      %s26 = sadd.s32 %s19, 1
      %s27 = ssub.s32 %s19, %s26
      %p28 = scmp.eq.s32.totalorder %s27, 0
      %s30 = sadd.s32 %s29, 1
      %s31 = scalar_select %p28, %s29, %s30
      %p34 = pneg %p28
      %p35 = scmp.eq.s32.totalorder %s19, 1
      %p36 = por %p34, %p35
      %p37 = scmp.ne.s32.totalorder %s29, %s32
      %p38 = scmp.eq.s32.totalorder %s19, 0
      %p39 = por %p37, %p38
      %p40 = scmp.ne.s32.totalorder %s29, %s32
      %p41 = scmp.eq.s32.totalorder %s24, 1
      %p42 = por %p40, %p41
      %p43 = scmp.ne.s32.totalorder %s32, %s33
      %p44 = scmp.eq.s32.totalorder %s24, 0
      %p45 = por %p43, %p44
      %p46 = scmp.ne.s32.totalorder %s32, %s33
      %p47 = scmp.eq.s32.totalorder %s25, 1
      %p48 = por %p46, %p47
      %p50 = scmp.ne.s32.totalorder %s33, %s49
      %p51 = scmp.eq.s32.totalorder %s25, 0
      %p52 = por %p50, %p51
      %s54 = sadd.s32 %s53, 1
      %p57 = scmp.eq.s32.totalorder %s19, 1
      %p58 = scmp.ne.s32.totalorder %s53, %s55
      %p59 = scmp.eq.s32.totalorder %s19, 0
      %p60 = por %p58, %p59
      %p61 = scmp.ne.s32.totalorder %s53, %s55
      %p62 = scmp.eq.s32.totalorder %s24, 1
      %p63 = por %p61, %p62
      %p64 = scmp.ne.s32.totalorder %s55, %s56
      %p65 = scmp.eq.s32.totalorder %s24, 0
      %p66 = por %p64, %p65
      %p67 = scmp.ne.s32.totalorder %s55, %s56
      %p68 = scmp.eq.s32.totalorder %s25, 1
      %p69 = por %p67, %p68
      %p71 = scmp.ne.s32.totalorder %s56, %s70
      %p72 = scmp.eq.s32.totalorder %s25, 0
      %p73 = por %p71, %p72
      %s75 = sadd.s32 %s74, 1
      %p78 = scmp.eq.s32.totalorder %s19, 1
      %p79 = scmp.ne.s32.totalorder %s74, %s76
      %p80 = scmp.eq.s32.totalorder %s19, 0
      %p81 = por %p79, %p80
      %p82 = scmp.ne.s32.totalorder %s74, %s76
      %p83 = scmp.eq.s32.totalorder %s24, 1
      %p84 = por %p82, %p83
      %p85 = scmp.ne.s32.totalorder %s76, %s77
      %p86 = scmp.eq.s32.totalorder %s24, 0
      %p87 = por %p85, %p86
      %p88 = scmp.ne.s32.totalorder %s76, %s77
      %p89 = scmp.eq.s32.totalorder %s25, 1
      %p90 = por %p88, %p89
      %p92 = scmp.ne.s32.totalorder %s77, %s91
      %p93 = scmp.eq.s32.totalorder %s25, 0
      %p94 = por %p92, %p93
      %s96 = sadd.s32 %s95, 1
      %p99 = scmp.eq.s32.totalorder %s19, 1
      %p100 = scmp.ne.s32.totalorder %s95, %s97
      %p101 = scmp.eq.s32.totalorder %s19, 0
      %p102 = por %p100, %p101
      %p103 = scmp.ne.s32.totalorder %s95, %s97
      %p104 = scmp.eq.s32.totalorder %s24, 1
      %p105 = por %p103, %p104
      %p106 = scmp.ne.s32.totalorder %s97, %s98
      %p107 = scmp.eq.s32.totalorder %s24, 0
      %p108 = por %p106, %p107
      %p109 = scmp.ne.s32.totalorder %s97, %s98
      %p110 = scmp.eq.s32.totalorder %s25, 1
      %p111 = por %p109, %p110
      %p113 = scmp.ne.s32.totalorder %s98, %s112
      %p114 = scmp.eq.s32.totalorder %s25, 0
      %p115 = por %p113, %p114
      %s117 = sadd.s32 %s116, 1
      %p120 = scmp.eq.s32.totalorder %s19, 1
      %p121 = scmp.ne.s32.totalorder %s116, %s118
      %p122 = scmp.eq.s32.totalorder %s19, 0
      %p123 = por %p121, %p122
      %p124 = scmp.ne.s32.totalorder %s116, %s118
      %p125 = scmp.eq.s32.totalorder %s24, 1
      %p126 = por %p124, %p125
      %p127 = scmp.ne.s32.totalorder %s118, %s119
      %p128 = scmp.eq.s32.totalorder %s24, 0
      %p129 = por %p127, %p128
      %p130 = scmp.ne.s32.totalorder %s118, %s119
      %p131 = scmp.eq.s32.totalorder %s25, 1
      %p132 = por %p130, %p131
      %p134 = scmp.ne.s32.totalorder %s119, %s133
      %p135 = scmp.eq.s32.totalorder %s25, 0
      %p136 = por %p134, %p135
      %s138 = sadd.s32 %s137, 1
      %p141 = scmp.eq.s32.totalorder %s19, 1
      %p142 = scmp.ne.s32.totalorder %s137, %s139
      %p143 = scmp.eq.s32.totalorder %s19, 0
      %p144 = por %p142, %p143
      %p145 = scmp.ne.s32.totalorder %s137, %s139
      %p146 = scmp.eq.s32.totalorder %s24, 1
      %p147 = por %p145, %p146
      %p148 = scmp.ne.s32.totalorder %s139, %s140
      %p149 = scmp.eq.s32.totalorder %s24, 0
      %p150 = por %p148, %p149
      %p151 = scmp.ne.s32.totalorder %s139, %s140
      %p152 = scmp.eq.s32.totalorder %s25, 1
      %p153 = por %p151, %p152
      %p155 = scmp.ne.s32.totalorder %s140, %s154
      %p156 = scmp.eq.s32.totalorder %s25, 0
      %p157 = por %p155, %p156
      %s159 = sadd.s32 %s158, 1
      %p162 = scmp.eq.s32.totalorder %s19, 1
      %p163 = scmp.ne.s32.totalorder %s158, %s160
      %p164 = scmp.eq.s32.totalorder %s19, 0
      %p165 = por %p163, %p164
      %p166 = scmp.ne.s32.totalorder %s158, %s160
      %p167 = scmp.eq.s32.totalorder %s24, 1
      %p168 = por %p166, %p167
      %p169 = scmp.ne.s32.totalorder %s160, %s161
      %p170 = scmp.eq.s32.totalorder %s24, 0
      %p171 = por %p169, %p170
      %p172 = scmp.ne.s32.totalorder %s160, %s161
      %p173 = scmp.eq.s32.totalorder %s25, 1
      %p174 = por %p172, %p173
      %p176 = scmp.ne.s32.totalorder %s161, %s175
      %p177 = scmp.eq.s32.totalorder %s25, 0
      %p178 = por %p176, %p177
      %s179 = ssub.s32 %s19, %s26
      %p180 = scmp.eq.s32.totalorder %s179, 0
      %s182 = sadd.s32 %s181, 1
      %s183 = scalar_select %p180, %s181, %s182
      %p186 = pneg %p180
      %p187 = scmp.eq.s32.totalorder %s19, 1
      %p188 = por %p186, %p187
      %p189 = scmp.ne.s32.totalorder %s181, %s184
      %p190 = scmp.eq.s32.totalorder %s19, 0
      %p191 = por %p189, %p190
      %p192 = scmp.ne.s32.totalorder %s181, %s184
      %p193 = scmp.eq.s32.totalorder %s24, 1
      %p194 = por %p192, %p193
      %p195 = scmp.ne.s32.totalorder %s184, %s185
      %p196 = scmp.eq.s32.totalorder %s24, 0
      %p197 = por %p195, %p196
      %p198 = scmp.ne.s32.totalorder %s184, %s185
      %p199 = scmp.eq.s32.totalorder %s25, 1
      %p200 = por %p198, %p199
      %p202 = scmp.ne.s32.totalorder %s185, %s201
      %p203 = scmp.eq.s32.totalorder %s25, 0
      %p204 = por %p202, %p203
      %p205 = scmp.le.s32.totalorder 1, %s19
      %p206 = scmp.lt.s32.totalorder %s19, 3
      %p207 = pnand %p205, %p206
      %p208 = pneg %p207
      // Predicated region
      $region9: #{tpu_custom_call.1} parent=5 // pred_check
        _
      $region10: #{tpu_custom_call.1} parent=5 // pred_check_branch
        %210 = sbr.rel (%p207) target = $region12
      $region11: #{tpu_custom_call.1} parent=5 // pred_region
        %s211 = ssub.s32 %s19, 1
        // Predicated region
        $region13: #{tpu_custom_call.1} parent=11 // pred_check
          %p212 = pneg %p66
        $region14: #{tpu_custom_call.1} parent=11 // pred_check_branch
          %214 = sbr.rel (%p212) target = $region16
        $region15: #{tpu_custom_call.1} parent=11 // pred_region
          _
        $region16: #{tpu_custom_call.1} parent=11 // pred_fallthru
          _
        // Predicated region
        $region17: #{tpu_custom_call.1} parent=11 // pred_check
          %p215 = pneg %p87
        $region18: #{tpu_custom_call.1} parent=11 // pred_check_branch
          %217 = sbr.rel (%p215) target = $region20
        $region19: #{tpu_custom_call.1} parent=11 // pred_region
          _
        $region20: #{tpu_custom_call.1} parent=11 // pred_fallthru
          _
        // Predicated region
        $region21: #{tpu_custom_call.1} parent=11 // pred_check
          %p218 = pneg %p108
        $region22: #{tpu_custom_call.1} parent=11 // pred_check_branch
          %220 = sbr.rel (%p218) target = $region24
        $region23: #{tpu_custom_call.1} parent=11 // pred_region
          _
        $region24: #{tpu_custom_call.1} parent=11 // pred_fallthru
          _
        // Predicated region
        $region25: #{tpu_custom_call.1} parent=11 // pred_check
          %p221 = pneg %p129
        $region26: #{tpu_custom_call.1} parent=11 // pred_check_branch
          %223 = sbr.rel (%p221) target = $region28
        $region27: #{tpu_custom_call.1} parent=11 // pred_region
          _
        $region28: #{tpu_custom_call.1} parent=11 // pred_fallthru
          _
        // Predicated region
        $region29: #{tpu_custom_call.1} parent=11 // pred_check
          %p224 = pneg %p150
        $region30: #{tpu_custom_call.1} parent=11 // pred_check_branch
          %226 = sbr.rel (%p224) target = $region32
        $region31: #{tpu_custom_call.1} parent=11 // pred_region
          _
        $region32: #{tpu_custom_call.1} parent=11 // pred_fallthru
          _
        // Predicated region
        $region33: #{tpu_custom_call.1} parent=11 // pred_check
          %p227 = pneg %p171
        $region34: #{tpu_custom_call.1} parent=11 // pred_check_branch
          %229 = sbr.rel (%p227) target = $region36
        $region35: #{tpu_custom_call.1} parent=11 // pred_region
          _
        $region36: #{tpu_custom_call.1} parent=11 // pred_fallthru
          _
      $region12: #{tpu_custom_call.1} parent=5 // pred_fallthru
        _
      %p230 = scmp.lt.s32.totalorder %s19, 2
      // Predicated region
      $region37: #{tpu_custom_call.1} parent=5 // pred_check
        %p231 = pneg %p230
      $region38: #{tpu_custom_call.1} parent=5 // pred_check_branch
        %233 = sbr.rel (%p231) target = $region40
      $region39: #{tpu_custom_call.1} parent=5 // pred_region
        // Predicated region
        $region41: #{tpu_custom_call.1} parent=39 // pred_check
          %p234 = pneg %p39
        $region42: #{tpu_custom_call.1} parent=39 // pred_check_branch
          %236 = sbr.rel (%p234) target = $region44
        $region43: #{tpu_custom_call.1} parent=39 // pred_region
          %s237 = sand.u32 %s29, 1
          %s238 = scalar_lea.sflag [#allocation4], %s237
          %s239 = sand.u32 %s29, 1
          %s240 = smul.addr %s239, 16
          %s241 = scalar_lea.vmem [#allocation3], %s240
          %243 = vsyncadd %s238, 0
          %s244 = smul.addr %s19, 4
          %s245 = smul.addr %s244, 4
          %s246 = scalar_lea.hbm %s0, %s245
          %s248 = sshll.u32 %s246, 4
          %s249 = int_to_ptr.hbm [resolvable:$true] %s248
          %s250 = sshll.u32 %s241, 4
          %s251 = int_to_ptr.vmem [resolvable:$true] %s250
          %253 = dma.hbm_to_vmem [thread:$0]  %s249, 256, %s251, %s238
        $region44: #{tpu_custom_call.1} parent=39 // pred_fallthru
          _
      $region40: #{tpu_custom_call.1} parent=5 // pred_fallthru
        _
      %p254 = scmp.le.s32.totalorder 1, %s19
      %p255 = scmp.lt.s32.totalorder %s19, 3
      %p256 = pnand %p254, %p255
      %p257 = pneg %p256
      // Predicated region
      $region45: #{tpu_custom_call.1} parent=5 // pred_check
        _
      $region46: #{tpu_custom_call.1} parent=5 // pred_check_branch
        %259 = sbr.rel (%p256) target = $region48
      $region47: #{tpu_custom_call.1} parent=5 // pred_region
        %s260 = ssub.s32 %s19, 1
        %s261 = sand.u32 %s32, 1
        %s262 = scalar_lea.sflag [#allocation4], %s261
        %s263 = sand.u32 %s32, 1
        %s264 = smul.addr %s263, 16
        %s265 = scalar_lea.vmem [#allocation3], %s264
        // Predicated region
        $region49: #{tpu_custom_call.1} parent=47 // pred_check
          %p266 = pneg %p45
        $region50: #{tpu_custom_call.1} parent=47 // pred_check_branch
          %268 = sbr.rel (%p266) target = $region52
        $region51: #{tpu_custom_call.1} parent=47 // pred_region
          %270 = dma.done %s262, 256
        $region52: #{tpu_custom_call.1} parent=47 // pred_fallthru
          _
        %s271 = sand.u32 %s32, 1
        %s272 = scalar_lea.sflag [#allocation4], %s271
        %s273 = sand.u32 %s32, 1
        %s274 = smul.addr %s273, 16
        %s275 = scalar_lea.vmem [#allocation3], %s274
        %p276 = pneg %p45
        %p277 = pneg %p42
        %p278 = pneg %p66
        %p279 = pneg %p63
        %p280 = pneg %p87
        %p281 = pneg %p84
        %p282 = pneg %p108
        %p283 = pneg %p105
        %p284 = pneg %p129
        %p285 = pneg %p126
        %p286 = pneg %p150
        %p287 = pneg %p147
        %p288 = pneg %p171
        %p289 = pneg %p168
        %p290 = pneg %p197
        %p291 = pneg %p194
        %s292 = sand.u32 %s184, 1
        %s293 = scalar_lea.sflag [#allocation5], %s292
        %s294 = sand.u32 %s184, 1
        %s295 = smul.addr %s294, 16
        %s296 = scalar_lea.vmem [#allocation6], %s295
        %v298 = vld [vmem:[%s265] sm:$0xff]
        %v299 = vld [vmem:[%s265 + $0x8] sm:$0xff]
        %v300 = vld [vmem:[%s1] sm:$0x3]
        %303 = vst [vmem:[#allocation1] ss:$2 sm:$0xff] %v298
        %s304 = scalar_lea.vmem [#allocation1], 16
        %305 = vst [vmem:[%s304] ss:$2 sm:$0xff] %v299
        %v306 = vld.sshfl [vmem:[#allocation1] sm:$0xff pattern:$0x75316420]
        %v307 = vld.sshfl [vmem:[#allocation1 + $0x8] sm:$0xff pattern:$0x75316420]
        %v308 = vld.sshfl [vmem:[#allocation1 + $0x10] sm:$0xff pattern:$0x75316420]
        %v309 = vld.sshfl [vmem:[#allocation1 + $0x18] sm:$0xff pattern:$0x75316420]
        %v314 = vpack.c.bf16 %v306, %v306
        %v315 = vpack.c.bf16 %v307, %v307
        %v316 = vpack.c.bf16 %v308, %v308
        %v317 = vpack.c.bf16 %v309, %v309
        %v318 = vld [vmem:[%s2] sm:$0xf]
        %320 = vset.pattern.permute.xlu0 0
        %321 = vperm.xlu0 %320, %v318
        %v322 = vpop.permute.xlu0 %321
        %vm324 = vcmask 31744
        %v326 = vsel %vm324, %v300, 0
        %vm328 = vcmask 1041408
        %v330 = vsel %vm328, %v314, 0
        %v333 = vsel %vm328, %v315, 0
        %v336 = vsel %vm328, %v316, 0
        %v339 = vsel %vm328, %v317, 0
        %341 = vmatpush.bf16.msra.mxu0 0
        %342 = vmatpush.bf16.msra.mxu0 0
        %343 = vmatpush.bf16.msra.mxu0 0
        %344 = vmatpush.bf16.msra.mxu0 0
        %345 = vmatpush.bf16.msra.mxu0 0
        %346 = vmatpush.bf16.msra.mxu0 0
        %347 = vmatpush.bf16.msra.mxu0 0
        %348 = vmatpush.bf16.msra.mxu0 %v330
        %349 = vmatmul.bf16.gmra.mxu0 %v326
        %v350 = vpop.f32.mrf.mxu0
        %v351 = vadd.f32 %v322, %v350
        %v352 = vpop.f32.mrf.mxu0
        %353 = vdwg.mxu0
        %354 = vmatpush.bf16.msra.mxu0 0
        %355 = vmatpush.bf16.msra.mxu0 0
        %356 = vmatpush.bf16.msra.mxu0 0
        %357 = vmatpush.bf16.msra.mxu0 0
        %358 = vmatpush.bf16.msra.mxu0 0
        %359 = vmatpush.bf16.msra.mxu0 0
        %360 = vmatpush.bf16.msra.mxu0 0
        %361 = vmatpush.bf16.msra.mxu0 %v333
        %362 = vmatmul.bf16.gmra.mxu0 %v326
        %v363 = vpop.f32.mrf.mxu0
        %v364 = vadd.f32 %v322, %v363
        %v365 = vpop.f32.mrf.mxu0
        %366 = vdwg.mxu0
        %367 = vmatpush.bf16.msra.mxu0 0
        %368 = vmatpush.bf16.msra.mxu0 0
        %369 = vmatpush.bf16.msra.mxu0 0
        %370 = vmatpush.bf16.msra.mxu0 0
        %371 = vmatpush.bf16.msra.mxu0 0
        %372 = vmatpush.bf16.msra.mxu0 0
        %373 = vmatpush.bf16.msra.mxu0 0
        %374 = vmatpush.bf16.msra.mxu0 %v336
        %375 = vmatmul.bf16.gmra.mxu0 %v326
        %v376 = vpop.f32.mrf.mxu0
        %v377 = vadd.f32 %v322, %v376
        %v378 = vpop.f32.mrf.mxu0
        %379 = vdwg.mxu0
        %380 = vmatpush.bf16.msra.mxu0 0
        %381 = vmatpush.bf16.msra.mxu0 0
        %382 = vmatpush.bf16.msra.mxu0 0
        %383 = vmatpush.bf16.msra.mxu0 0
        %384 = vmatpush.bf16.msra.mxu0 0
        %385 = vmatpush.bf16.msra.mxu0 0
        %386 = vmatpush.bf16.msra.mxu0 0
        %387 = vmatpush.bf16.msra.mxu0 %v339
        %388 = vmatmul.bf16.gmra.mxu0 %v326
        %v389 = vpop.f32.mrf.mxu0
        %v390 = vadd.f32 %v322, %v389
        %v391 = vpop.f32.mrf.mxu0
        %392 = vdwg.mxu0
        %v393 = vlaneseq
        %v394 = vand.u32 %v393, 127
        %v395 = vadd.s32 %v394, 128
        %v396 = vadd.s32 %v394, 256
        %v397 = vadd.s32 %v394, 384
        %v398 = vand.u32 %v394, 63
        %v399 = vand.u32 %v395, 63
        %v400 = vand.u32 %v396, 63
        %v401 = vand.u32 %v397, 63
        %v402 = vand.u32 %v394, 7
        %v403 = vand.u32 %v395, 7
        %v404 = vand.u32 %v396, 7
        %v405 = vand.u32 %v397, 7
        %406 = vrot.lane.b32.xlu0 %v351, 73
        %v407 = vpop.permute.xlu0 %406
        %408 = vrot.lane.b32.xlu0 %v364, 73
        %v409 = vpop.permute.xlu0 %408
        %410 = vrot.lane.b32.xlu0 %v377, 73
        %v411 = vpop.permute.xlu0 %410
        %412 = vrot.lane.b32.xlu0 %v390, 73
        %v413 = vpop.permute.xlu0 %412
        %vm414 = vcmp.lt.s32.totalorder %v394, 73
        %v415 = vsel %vm414, %v411, %v413
        %v416 = vsel %vm414, %v409, %v411
        %v417 = vsel %vm414, %v407, %v409
        %v418 = vsel %vm414, %v413, %v407
        %vm419 = vcmp.ge.s32.totalorder %v394, 64
        %vm420 = vcmp.ge.s32.totalorder %v395, 64
        %vm421 = vcmp.ge.s32.totalorder %v396, 64
        %vm422 = vcmp.ge.s32.totalorder %v397, 64
        %vm423 = vcmp.lt.s32.totalorder %v394, 512
        %vm424 = vcmp.lt.s32.totalorder %v395, 512
        %vm425 = vcmp.lt.s32.totalorder %v396, 512
        %vm426 = vcmp.lt.s32.totalorder %v397, 512
        %vm427 = vmand %vm419, %vm423
        %vm428 = vmand %vm420, %vm424
        %vm429 = vmand %vm421, %vm425
        %vm430 = vmand %vm422, %vm426
        %vm431 = vcmp.ge.s32.totalorder %v398, 8
        %vm432 = vcmp.ge.s32.totalorder %v399, 8
        %vm433 = vcmp.ge.s32.totalorder %v400, 8
        %vm434 = vcmp.ge.s32.totalorder %v401, 8
        %vm435 = vcmp.lt.s32.totalorder %v398, 64
        %vm436 = vcmp.lt.s32.totalorder %v399, 64
        %vm437 = vcmp.lt.s32.totalorder %v400, 64
        %vm438 = vcmp.lt.s32.totalorder %v401, 64
        %vm439 = vmand %vm431, %vm435
        %vm440 = vmand %vm432, %vm436
        %vm441 = vmand %vm433, %vm437
        %vm442 = vmand %vm434, %vm438
        %vm443 = vmand %vm427, %vm439
        %vm444 = vmand %vm428, %vm440
        %vm445 = vmand %vm429, %vm441
        %vm446 = vmand %vm430, %vm442
        %vm447 = vcmp.ge.s32.totalorder %v402, 1
        %vm448 = vcmp.ge.s32.totalorder %v403, 1
        %vm449 = vcmp.ge.s32.totalorder %v404, 1
        %vm450 = vcmp.ge.s32.totalorder %v405, 1
        %vm451 = vcmp.lt.s32.totalorder %v402, 8
        %vm452 = vcmp.lt.s32.totalorder %v403, 8
        %vm453 = vcmp.lt.s32.totalorder %v404, 8
        %vm454 = vcmp.lt.s32.totalorder %v405, 8
        %vm455 = vmand %vm447, %vm451
        %vm456 = vmand %vm448, %vm452
        %vm457 = vmand %vm449, %vm453
        %vm458 = vmand %vm450, %vm454
        %vm459 = vmand %vm443, %vm455
        %vm460 = vmand %vm444, %vm456
        %vm461 = vmand %vm445, %vm457
        %vm462 = vmand %vm446, %vm458
        %v463 = vsel %vm459, 1, 0
        %v464 = vsel %vm460, 1, 0
        %v465 = vsel %vm461, 1, 0
        %v466 = vsel %vm462, 1, 0
        %vm467 = vcmp.eq.s32.totalorder %v463, 1
        %vm468 = vcmp.eq.s32.totalorder %v464, 1
        %vm469 = vcmp.eq.s32.totalorder %v465, 1
        %vm470 = vcmp.eq.s32.totalorder %v466, 1
        %v471 = vsel %vm467, %v418, 0.0
        %v472 = vsel %vm468, %v417, 0.0
        %v473 = vsel %vm469, %v416, 0.0
        %v474 = vsel %vm470, %v415, 0.0
        %475 = vst [vmem:[#allocation2] sm:$0xf] %v471
        %476 = vst [vmem:[#allocation2 + $0x8] sm:$0xf] %v472
        %477 = vst [vmem:[#allocation2 + $0x10] sm:$0xf] %v473
        %478 = vst [vmem:[#allocation2 + $0x18] sm:$0xf] %v474
        %479 = vrot.lane.b32.xlu0 %v351, 72
        %v480 = vpop.permute.xlu0 %479
        %481 = vrot.lane.b32.xlu0 %v364, 72
        %v482 = vpop.permute.xlu0 %481
        %483 = vrot.lane.b32.xlu0 %v377, 72
        %v484 = vpop.permute.xlu0 %483
        %485 = vrot.lane.b32.xlu0 %v390, 72
        %v486 = vpop.permute.xlu0 %485
        %vm487 = vcmp.lt.s32.totalorder %v394, 72
        %v488 = vsel %vm487, %v484, %v486
        %v489 = vsel %vm487, %v482, %v484
        %v490 = vsel %vm487, %v480, %v482
        %v491 = vsel %vm487, %v486, %v480
        %v492 = vsel %vm443, 1, 0
        %v493 = vsel %vm444, 1, 0
        %v494 = vsel %vm445, 1, 0
        %v495 = vsel %vm446, 1, 0
        %vm496 = vcmp.eq.s32.totalorder %v492, 1
        %vm497 = vcmp.eq.s32.totalorder %v493, 1
        %vm498 = vcmp.eq.s32.totalorder %v494, 1
        %vm499 = vcmp.eq.s32.totalorder %v495, 1
        %v500 = vsel %vm496, %v491, 0.0
        %v501 = vsel %vm497, %v490, 0.0
        %v502 = vsel %vm498, %v489, 0.0
        %v503 = vsel %vm499, %v488, 0.0
        %v508 = vrot.slane %v500, 4
        %v509 = vrot.slane %v501, 4
        %v510 = vrot.slane %v502, 4
        %v511 = vrot.slane %v503, 4
        %516 = vst [vmem:[#allocation2] sm:$0xf0] %v508
        %517 = vst [vmem:[#allocation2 + $0x8] sm:$0xf0] %v509
        %518 = vst [vmem:[#allocation2 + $0x10] sm:$0xf0] %v510
        %519 = vst [vmem:[#allocation2 + $0x18] sm:$0xf0] %v511
        %520 = vrot.lane.b32.xlu0 %v351, 71
        %v521 = vpop.permute.xlu0 %520
        %522 = vrot.lane.b32.xlu0 %v364, 71
        %v523 = vpop.permute.xlu0 %522
        %524 = vrot.lane.b32.xlu0 %v377, 71
        %v525 = vpop.permute.xlu0 %524
        %526 = vrot.lane.b32.xlu0 %v390, 71
        %v527 = vpop.permute.xlu0 %526
        %vm528 = vcmp.lt.s32.totalorder %v394, 71
        %v529 = vsel %vm528, %v525, %v527
        %v530 = vsel %vm528, %v523, %v525
        %v531 = vsel %vm528, %v521, %v523
        %v532 = vsel %vm528, %v527, %v521
        %vm533 = vcmp.ge.s32.totalorder %v402, 0
        %vm534 = vcmp.ge.s32.totalorder %v403, 0
        %vm535 = vcmp.ge.s32.totalorder %v404, 0
        %vm536 = vcmp.ge.s32.totalorder %v405, 0
        %vm537 = vcmp.lt.s32.totalorder %v402, 7
        %vm538 = vcmp.lt.s32.totalorder %v403, 7
        %vm539 = vcmp.lt.s32.totalorder %v404, 7
        %vm540 = vcmp.lt.s32.totalorder %v405, 7
        %vm541 = vmand %vm533, %vm537
        %vm542 = vmand %vm534, %vm538
        %vm543 = vmand %vm535, %vm539
        %vm544 = vmand %vm536, %vm540
        %vm545 = vmand %vm443, %vm541
        %vm546 = vmand %vm444, %vm542
        %vm547 = vmand %vm445, %vm543
        %vm548 = vmand %vm446, %vm544
        %v549 = vsel %vm545, 1, 0
        %v550 = vsel %vm546, 1, 0
        %v551 = vsel %vm547, 1, 0
        %v552 = vsel %vm548, 1, 0
        %vm553 = vcmp.eq.s32.totalorder %v549, 1
        %vm554 = vcmp.eq.s32.totalorder %v550, 1
        %vm555 = vcmp.eq.s32.totalorder %v551, 1
        %vm556 = vcmp.eq.s32.totalorder %v552, 1
        %v557 = vsel %vm553, %v532, 0.0
        %v558 = vsel %vm554, %v531, 0.0
        %v559 = vsel %vm555, %v530, 0.0
        %v560 = vsel %vm556, %v529, 0.0
        %561 = vst [vmem:[#allocation2 + $0x20] sm:$0xf] %v557
        %562 = vst [vmem:[#allocation2 + $0x28] sm:$0xf] %v558
        %563 = vst [vmem:[#allocation2 + $0x30] sm:$0xf] %v559
        %564 = vst [vmem:[#allocation2 + $0x38] sm:$0xf] %v560
        %565 = vrot.lane.b32.xlu0 %v351, 65
        %v566 = vpop.permute.xlu0 %565
        %567 = vrot.lane.b32.xlu0 %v364, 65
        %v568 = vpop.permute.xlu0 %567
        %569 = vrot.lane.b32.xlu0 %v377, 65
        %v570 = vpop.permute.xlu0 %569
        %571 = vrot.lane.b32.xlu0 %v390, 65
        %v572 = vpop.permute.xlu0 %571
        %vm573 = vcmp.lt.s32.totalorder %v394, 65
        %v574 = vsel %vm573, %v570, %v572
        %v575 = vsel %vm573, %v568, %v570
        %v576 = vsel %vm573, %v566, %v568
        %v577 = vsel %vm573, %v572, %v566
        %vm578 = vmand %vm427, %vm455
        %vm579 = vmand %vm428, %vm456
        %vm580 = vmand %vm429, %vm457
        %vm581 = vmand %vm430, %vm458
        %v582 = vsel %vm578, 1, 0
        %v583 = vsel %vm579, 1, 0
        %v584 = vsel %vm580, 1, 0
        %v585 = vsel %vm581, 1, 0
        %vm586 = vcmp.eq.s32.totalorder %v582, 1
        %vm587 = vcmp.eq.s32.totalorder %v583, 1
        %vm588 = vcmp.eq.s32.totalorder %v584, 1
        %vm589 = vcmp.eq.s32.totalorder %v585, 1
        %v590 = vsel %vm586, %v577, 0.0
        %v591 = vsel %vm587, %v576, 0.0
        %v592 = vsel %vm588, %v575, 0.0
        %v593 = vsel %vm589, %v574, 0.0
        %v598 = vrot.slane %v590, 4
        %v599 = vrot.slane %v591, 4
        %v600 = vrot.slane %v592, 4
        %v601 = vrot.slane %v593, 4
        %606 = vst [vmem:[#allocation2 + $0x20] sm:$0xf0] %v598
        %607 = vst [vmem:[#allocation2 + $0x28] sm:$0xf0] %v599
        %608 = vst [vmem:[#allocation2 + $0x30] sm:$0xf0] %v600
        %609 = vst [vmem:[#allocation2 + $0x38] sm:$0xf0] %v601
        %610 = vrot.lane.b32.xlu0 %v351, 64
        %v611 = vpop.permute.xlu0 %610
        %612 = vrot.lane.b32.xlu0 %v364, 64
        %v613 = vpop.permute.xlu0 %612
        %614 = vrot.lane.b32.xlu0 %v377, 64
        %v615 = vpop.permute.xlu0 %614
        %616 = vrot.lane.b32.xlu0 %v390, 64
        %v617 = vpop.permute.xlu0 %616
        %vm618 = vcmp.lt.s32.totalorder %v394, 64
        %v619 = vsel %vm618, %v615, %v617
        %v620 = vsel %vm618, %v613, %v615
        %v621 = vsel %vm618, %v611, %v613
        %v622 = vsel %vm618, %v617, %v611
        %v623 = vsel %vm427, 1, 0
        %v624 = vsel %vm428, 1, 0
        %v625 = vsel %vm429, 1, 0
        %v626 = vsel %vm430, 1, 0
        %vm627 = vcmp.eq.s32.totalorder %v623, 1
        %vm628 = vcmp.eq.s32.totalorder %v624, 1
        %vm629 = vcmp.eq.s32.totalorder %v625, 1
        %vm630 = vcmp.eq.s32.totalorder %v626, 1
        %v631 = vsel %vm627, %v622, 0.0
        %v632 = vsel %vm628, %v621, 0.0
        %v633 = vsel %vm629, %v620, 0.0
        %v634 = vsel %vm630, %v619, 0.0
        %635 = vst [vmem:[#allocation2 + $0x40] sm:$0xf] %v631
        %636 = vst [vmem:[#allocation2 + $0x48] sm:$0xf] %v632
        %637 = vst [vmem:[#allocation2 + $0x50] sm:$0xf] %v633
        %638 = vst [vmem:[#allocation2 + $0x58] sm:$0xf] %v634
        %639 = vrot.lane.b32.xlu0 %v351, 63
        %v640 = vpop.permute.xlu0 %639
        %641 = vrot.lane.b32.xlu0 %v364, 63
        %v642 = vpop.permute.xlu0 %641
        %643 = vrot.lane.b32.xlu0 %v377, 63
        %v644 = vpop.permute.xlu0 %643
        %645 = vrot.lane.b32.xlu0 %v390, 63
        %v646 = vpop.permute.xlu0 %645
        %vm647 = vcmp.lt.s32.totalorder %v394, 63
        %v648 = vsel %vm647, %v644, %v646
        %v649 = vsel %vm647, %v642, %v644
        %v650 = vsel %vm647, %v640, %v642
        %v651 = vsel %vm647, %v646, %v640
        %vm652 = vmand %vm427, %vm541
        %vm653 = vmand %vm428, %vm542
        %vm654 = vmand %vm429, %vm543
        %vm655 = vmand %vm430, %vm544
        %v656 = vsel %vm652, 1, 0
        %v657 = vsel %vm653, 1, 0
        %v658 = vsel %vm654, 1, 0
        %v659 = vsel %vm655, 1, 0
        %vm660 = vcmp.eq.s32.totalorder %v656, 1
        %vm661 = vcmp.eq.s32.totalorder %v657, 1
        %vm662 = vcmp.eq.s32.totalorder %v658, 1
        %vm663 = vcmp.eq.s32.totalorder %v659, 1
        %v664 = vsel %vm660, %v651, 0.0
        %v665 = vsel %vm661, %v650, 0.0
        %v666 = vsel %vm662, %v649, 0.0
        %v667 = vsel %vm663, %v648, 0.0
        %v672 = vrot.slane %v664, 4
        %v673 = vrot.slane %v665, 4
        %v674 = vrot.slane %v666, 4
        %v675 = vrot.slane %v667, 4
        %680 = vst [vmem:[#allocation2 + $0x40] sm:$0xf0] %v672
        %681 = vst [vmem:[#allocation2 + $0x48] sm:$0xf0] %v673
        %682 = vst [vmem:[#allocation2 + $0x50] sm:$0xf0] %v674
        %683 = vst [vmem:[#allocation2 + $0x58] sm:$0xf0] %v675
        %684 = vrot.lane.b32.xlu0 %v351, 57
        %v685 = vpop.permute.xlu0 %684
        %686 = vrot.lane.b32.xlu0 %v364, 57
        %v687 = vpop.permute.xlu0 %686
        %688 = vrot.lane.b32.xlu0 %v377, 57
        %v689 = vpop.permute.xlu0 %688
        %690 = vrot.lane.b32.xlu0 %v390, 57
        %v691 = vpop.permute.xlu0 %690
        %vm692 = vcmp.lt.s32.totalorder %v394, 57
        %v693 = vsel %vm692, %v689, %v691
        %v694 = vsel %vm692, %v687, %v689
        %v695 = vsel %vm692, %v685, %v687
        %v696 = vsel %vm692, %v691, %v685
        %vm697 = vcmp.ge.s32.totalorder %v398, 0
        %vm698 = vcmp.ge.s32.totalorder %v399, 0
        %vm699 = vcmp.ge.s32.totalorder %v400, 0
        %vm700 = vcmp.ge.s32.totalorder %v401, 0
        %vm701 = vcmp.lt.s32.totalorder %v398, 56
        %vm702 = vcmp.lt.s32.totalorder %v399, 56
        %vm703 = vcmp.lt.s32.totalorder %v400, 56
        %vm704 = vcmp.lt.s32.totalorder %v401, 56
        %vm705 = vmand %vm697, %vm701
        %vm706 = vmand %vm698, %vm702
        %vm707 = vmand %vm699, %vm703
        %vm708 = vmand %vm700, %vm704
        %vm709 = vmand %vm427, %vm705
        %vm710 = vmand %vm428, %vm706
        %vm711 = vmand %vm429, %vm707
        %vm712 = vmand %vm430, %vm708
        %vm713 = vmand %vm709, %vm455
        %vm714 = vmand %vm710, %vm456
        %vm715 = vmand %vm711, %vm457
        %vm716 = vmand %vm712, %vm458
        %v717 = vsel %vm713, 1, 0
        %v718 = vsel %vm714, 1, 0
        %v719 = vsel %vm715, 1, 0
        %v720 = vsel %vm716, 1, 0
        %vm721 = vcmp.eq.s32.totalorder %v717, 1
        %vm722 = vcmp.eq.s32.totalorder %v718, 1
        %vm723 = vcmp.eq.s32.totalorder %v719, 1
        %vm724 = vcmp.eq.s32.totalorder %v720, 1
        %v725 = vsel %vm721, %v696, 0.0
        %v726 = vsel %vm722, %v695, 0.0
        %v727 = vsel %vm723, %v694, 0.0
        %v728 = vsel %vm724, %v693, 0.0
        %729 = vst [vmem:[#allocation2 + $0x60] sm:$0xf] %v725
        %730 = vst [vmem:[#allocation2 + $0x68] sm:$0xf] %v726
        %731 = vst [vmem:[#allocation2 + $0x70] sm:$0xf] %v727
        %732 = vst [vmem:[#allocation2 + $0x78] sm:$0xf] %v728
        %733 = vrot.lane.b32.xlu0 %v351, 56
        %v734 = vpop.permute.xlu0 %733
        %735 = vrot.lane.b32.xlu0 %v364, 56
        %v736 = vpop.permute.xlu0 %735
        %737 = vrot.lane.b32.xlu0 %v377, 56
        %v738 = vpop.permute.xlu0 %737
        %739 = vrot.lane.b32.xlu0 %v390, 56
        %v740 = vpop.permute.xlu0 %739
        %vm741 = vcmp.lt.s32.totalorder %v394, 56
        %v742 = vsel %vm741, %v738, %v740
        %v743 = vsel %vm741, %v736, %v738
        %v744 = vsel %vm741, %v734, %v736
        %v745 = vsel %vm741, %v740, %v734
        %v746 = vsel %vm709, 1, 0
        %v747 = vsel %vm710, 1, 0
        %v748 = vsel %vm711, 1, 0
        %v749 = vsel %vm712, 1, 0
        %vm750 = vcmp.eq.s32.totalorder %v746, 1
        %vm751 = vcmp.eq.s32.totalorder %v747, 1
        %vm752 = vcmp.eq.s32.totalorder %v748, 1
        %vm753 = vcmp.eq.s32.totalorder %v749, 1
        %v754 = vsel %vm750, %v745, 0.0
        %v755 = vsel %vm751, %v744, 0.0
        %v756 = vsel %vm752, %v743, 0.0
        %v757 = vsel %vm753, %v742, 0.0
        %v762 = vrot.slane %v754, 4
        %v763 = vrot.slane %v755, 4
        %v764 = vrot.slane %v756, 4
        %v765 = vrot.slane %v757, 4
        %770 = vst [vmem:[#allocation2 + $0x60] sm:$0xf0] %v762
        %771 = vst [vmem:[#allocation2 + $0x68] sm:$0xf0] %v763
        %772 = vst [vmem:[#allocation2 + $0x70] sm:$0xf0] %v764
        %773 = vst [vmem:[#allocation2 + $0x78] sm:$0xf0] %v765
        %774 = vrot.lane.b32.xlu0 %v351, 55
        %v775 = vpop.permute.xlu0 %774
        %776 = vrot.lane.b32.xlu0 %v364, 55
        %v777 = vpop.permute.xlu0 %776
        %778 = vrot.lane.b32.xlu0 %v377, 55
        %v779 = vpop.permute.xlu0 %778
        %780 = vrot.lane.b32.xlu0 %v390, 55
        %v781 = vpop.permute.xlu0 %780
        %vm782 = vcmp.lt.s32.totalorder %v394, 55
        %v783 = vsel %vm782, %v779, %v781
        %v784 = vsel %vm782, %v777, %v779
        %v785 = vsel %vm782, %v775, %v777
        %v786 = vsel %vm782, %v781, %v775
        %vm787 = vmand %vm709, %vm541
        %vm788 = vmand %vm710, %vm542
        %vm789 = vmand %vm711, %vm543
        %vm790 = vmand %vm712, %vm544
        %v791 = vsel %vm787, 1, 0
        %v792 = vsel %vm788, 1, 0
        %v793 = vsel %vm789, 1, 0
        %v794 = vsel %vm790, 1, 0
        %vm795 = vcmp.eq.s32.totalorder %v791, 1
        %vm796 = vcmp.eq.s32.totalorder %v792, 1
        %vm797 = vcmp.eq.s32.totalorder %v793, 1
        %vm798 = vcmp.eq.s32.totalorder %v794, 1
        %v799 = vsel %vm795, %v786, 0.0
        %v800 = vsel %vm796, %v785, 0.0
        %v801 = vsel %vm797, %v784, 0.0
        %v802 = vsel %vm798, %v783, 0.0
        %803 = vst [vmem:[#allocation2 + $0x80] sm:$0xf] %v799
        %804 = vst [vmem:[#allocation2 + $0x88] sm:$0xf] %v800
        %805 = vst [vmem:[#allocation2 + $0x90] sm:$0xf] %v801
        %806 = vst [vmem:[#allocation2 + $0x98] sm:$0xf] %v802
        %807 = vrot.lane.b32.xlu0 %v351, 9
        %v808 = vpop.permute.xlu0 %807
        %809 = vrot.lane.b32.xlu0 %v364, 9
        %v810 = vpop.permute.xlu0 %809
        %811 = vrot.lane.b32.xlu0 %v377, 9
        %v812 = vpop.permute.xlu0 %811
        %813 = vrot.lane.b32.xlu0 %v390, 9
        %v814 = vpop.permute.xlu0 %813
        %vm815 = vcmp.lt.s32.totalorder %v394, 9
        %v816 = vsel %vm815, %v812, %v814
        %v817 = vsel %vm815, %v810, %v812
        %v818 = vsel %vm815, %v808, %v810
        %v819 = vsel %vm815, %v814, %v808
        %vm820 = vmand %vm439, %vm455
        %vm821 = vmand %vm440, %vm456
        %vm822 = vmand %vm441, %vm457
        %vm823 = vmand %vm442, %vm458
        %v824 = vsel %vm820, 1, 0
        %v825 = vsel %vm821, 1, 0
        %v826 = vsel %vm822, 1, 0
        %v827 = vsel %vm823, 1, 0
        %vm828 = vcmp.eq.s32.totalorder %v824, 1
        %vm829 = vcmp.eq.s32.totalorder %v825, 1
        %vm830 = vcmp.eq.s32.totalorder %v826, 1
        %vm831 = vcmp.eq.s32.totalorder %v827, 1
        %v832 = vsel %vm828, %v819, 0.0
        %v833 = vsel %vm829, %v818, 0.0
        %v834 = vsel %vm830, %v817, 0.0
        %v835 = vsel %vm831, %v816, 0.0
        %v840 = vrot.slane %v832, 4
        %v841 = vrot.slane %v833, 4
        %v842 = vrot.slane %v834, 4
        %v843 = vrot.slane %v835, 4
        %848 = vst [vmem:[#allocation2 + $0x80] sm:$0xf0] %v840
        %849 = vst [vmem:[#allocation2 + $0x88] sm:$0xf0] %v841
        %850 = vst [vmem:[#allocation2 + $0x90] sm:$0xf0] %v842
        %851 = vst [vmem:[#allocation2 + $0x98] sm:$0xf0] %v843
        %852 = vrot.lane.b32.xlu0 %v351, 8
        %v853 = vpop.permute.xlu0 %852
        %854 = vrot.lane.b32.xlu0 %v364, 8
        %v855 = vpop.permute.xlu0 %854
        %856 = vrot.lane.b32.xlu0 %v377, 8
        %v857 = vpop.permute.xlu0 %856
        %858 = vrot.lane.b32.xlu0 %v390, 8
        %v859 = vpop.permute.xlu0 %858
        %vm860 = vcmp.lt.s32.totalorder %v394, 8
        %v861 = vsel %vm860, %v857, %v859
        %v862 = vsel %vm860, %v855, %v857
        %v863 = vsel %vm860, %v853, %v855
        %v864 = vsel %vm860, %v859, %v853
        %v865 = vsel %vm439, 1, 0
        %v866 = vsel %vm440, 1, 0
        %v867 = vsel %vm441, 1, 0
        %v868 = vsel %vm442, 1, 0
        %vm869 = vcmp.eq.s32.totalorder %v865, 1
        %vm870 = vcmp.eq.s32.totalorder %v866, 1
        %vm871 = vcmp.eq.s32.totalorder %v867, 1
        %vm872 = vcmp.eq.s32.totalorder %v868, 1
        %v873 = vsel %vm869, %v864, 0.0
        %v874 = vsel %vm870, %v863, 0.0
        %v875 = vsel %vm871, %v862, 0.0
        %v876 = vsel %vm872, %v861, 0.0
        %877 = vst [vmem:[#allocation2 + $0xa0] sm:$0xf] %v873
        %878 = vst [vmem:[#allocation2 + $0xa8] sm:$0xf] %v874
        %879 = vst [vmem:[#allocation2 + $0xb0] sm:$0xf] %v875
        %880 = vst [vmem:[#allocation2 + $0xb8] sm:$0xf] %v876
        %881 = vrot.lane.b32.xlu0 %v351, 7
        %v882 = vpop.permute.xlu0 %881
        %883 = vrot.lane.b32.xlu0 %v364, 7
        %v884 = vpop.permute.xlu0 %883
        %885 = vrot.lane.b32.xlu0 %v377, 7
        %v886 = vpop.permute.xlu0 %885
        %887 = vrot.lane.b32.xlu0 %v390, 7
        %v888 = vpop.permute.xlu0 %887
        %vm889 = vcmp.lt.s32.totalorder %v394, 7
        %v890 = vsel %vm889, %v886, %v888
        %v891 = vsel %vm889, %v884, %v886
        %v892 = vsel %vm889, %v882, %v884
        %v893 = vsel %vm889, %v888, %v882
        %vm894 = vmand %vm439, %vm541
        %vm895 = vmand %vm440, %vm542
        %vm896 = vmand %vm441, %vm543
        %vm897 = vmand %vm442, %vm544
        %v898 = vsel %vm894, 1, 0
        %v899 = vsel %vm895, 1, 0
        %v900 = vsel %vm896, 1, 0
        %v901 = vsel %vm897, 1, 0
        %vm902 = vcmp.eq.s32.totalorder %v898, 1
        %vm903 = vcmp.eq.s32.totalorder %v899, 1
        %vm904 = vcmp.eq.s32.totalorder %v900, 1
        %vm905 = vcmp.eq.s32.totalorder %v901, 1
        %v906 = vsel %vm902, %v893, 0.0
        %v907 = vsel %vm903, %v892, 0.0
        %v908 = vsel %vm904, %v891, 0.0
        %v909 = vsel %vm905, %v890, 0.0
        %v914 = vrot.slane %v906, 4
        %v915 = vrot.slane %v907, 4
        %v916 = vrot.slane %v908, 4
        %v917 = vrot.slane %v909, 4
        %922 = vst [vmem:[#allocation2 + $0xa0] sm:$0xf0] %v914
        %923 = vst [vmem:[#allocation2 + $0xa8] sm:$0xf0] %v915
        %924 = vst [vmem:[#allocation2 + $0xb0] sm:$0xf0] %v916
        %925 = vst [vmem:[#allocation2 + $0xb8] sm:$0xf0] %v917
        %926 = vrot.lane.b32.xlu0 %v351, 1
        %v927 = vpop.permute.xlu0 %926
        %928 = vrot.lane.b32.xlu0 %v364, 1
        %v929 = vpop.permute.xlu0 %928
        %930 = vrot.lane.b32.xlu0 %v377, 1
        %v931 = vpop.permute.xlu0 %930
        %932 = vrot.lane.b32.xlu0 %v390, 1
        %v933 = vpop.permute.xlu0 %932
        %vm934 = vcmp.lt.s32.totalorder %v394, 1
        %v935 = vsel %vm934, %v931, %v933
        %v936 = vsel %vm934, %v929, %v931
        %v937 = vsel %vm934, %v927, %v929
        %v938 = vsel %vm934, %v933, %v927
        %v939 = vsel %vm455, 1, 0
        %v940 = vsel %vm456, 1, 0
        %v941 = vsel %vm457, 1, 0
        %v942 = vsel %vm458, 1, 0
        %vm943 = vcmp.eq.s32.totalorder %v939, 1
        %vm944 = vcmp.eq.s32.totalorder %v940, 1
        %vm945 = vcmp.eq.s32.totalorder %v941, 1
        %vm946 = vcmp.eq.s32.totalorder %v942, 1
        %v947 = vsel %vm943, %v938, 0.0
        %v948 = vsel %vm944, %v937, 0.0
        %v949 = vsel %vm945, %v936, 0.0
        %v950 = vsel %vm946, %v935, 0.0
        %951 = vst [vmem:[#allocation2 + $0xc0] sm:$0xf] %v947
        %952 = vst [vmem:[#allocation2 + $0xc8] sm:$0xf] %v948
        %953 = vst [vmem:[#allocation2 + $0xd0] sm:$0xf] %v949
        %954 = vst [vmem:[#allocation2 + $0xd8] sm:$0xf] %v950
        %v959 = vrot.slane %v351, 4
        %v960 = vrot.slane %v364, 4
        %v961 = vrot.slane %v377, 4
        %v962 = vrot.slane %v390, 4
        %967 = vst [vmem:[#allocation2 + $0xc0] sm:$0xf0] %v959
        %968 = vst [vmem:[#allocation2 + $0xc8] sm:$0xf0] %v960
        %969 = vst [vmem:[#allocation2 + $0xd0] sm:$0xf0] %v961
        %970 = vst [vmem:[#allocation2 + $0xd8] sm:$0xf0] %v962
        %971 = vrot.lane.b32.xlu0 %v351, 127
        %v972 = vpop.permute.xlu0 %971
        %973 = vrot.lane.b32.xlu0 %v364, 127
        %v974 = vpop.permute.xlu0 %973
        %975 = vrot.lane.b32.xlu0 %v377, 127
        %v976 = vpop.permute.xlu0 %975
        %977 = vrot.lane.b32.xlu0 %v390, 127
        %v978 = vpop.permute.xlu0 %977
        %vm979 = vcmp.lt.s32.totalorder %v394, 127
        %v980 = vsel %vm979, %v976, %v978
        %v981 = vsel %vm979, %v974, %v976
        %v982 = vsel %vm979, %v972, %v974
        %v983 = vsel %vm979, %v978, %v972
        %v984 = vsel %vm541, 1, 0
        %v985 = vsel %vm542, 1, 0
        %v986 = vsel %vm543, 1, 0
        %v987 = vsel %vm544, 1, 0
        %vm988 = vcmp.eq.s32.totalorder %v984, 1
        %vm989 = vcmp.eq.s32.totalorder %v985, 1
        %vm990 = vcmp.eq.s32.totalorder %v986, 1
        %vm991 = vcmp.eq.s32.totalorder %v987, 1
        %v992 = vsel %vm988, %v982, 0.0
        %v993 = vsel %vm989, %v981, 0.0
        %v994 = vsel %vm990, %v980, 0.0
        %v995 = vsel %vm991, %v983, 0.0
        %996 = vst [vmem:[#allocation2 + $0xe0] sm:$0xf] %v992
        %997 = vst [vmem:[#allocation2 + $0xe8] sm:$0xf] %v993
        %998 = vst [vmem:[#allocation2 + $0xf0] sm:$0xf] %v994
        %999 = vst [vmem:[#allocation2 + $0xf8] sm:$0xf] %v995
        %1000 = vrot.lane.b32.xlu0 %v351, 121
        %v1001 = vpop.permute.xlu0 %1000
        %1002 = vrot.lane.b32.xlu0 %v364, 121
        %v1003 = vpop.permute.xlu0 %1002
        %1004 = vrot.lane.b32.xlu0 %v377, 121
        %v1005 = vpop.permute.xlu0 %1004
        %1006 = vrot.lane.b32.xlu0 %v390, 121
        %v1007 = vpop.permute.xlu0 %1006
        %vm1008 = vcmp.lt.s32.totalorder %v394, 121
        %v1009 = vsel %vm1008, %v1005, %v1007
        %v1010 = vsel %vm1008, %v1003, %v1005
        %v1011 = vsel %vm1008, %v1001, %v1003
        %v1012 = vsel %vm1008, %v1007, %v1001
        %vm1013 = vmand %vm705, %vm455
        %vm1014 = vmand %vm706, %vm456
        %vm1015 = vmand %vm707, %vm457
        %vm1016 = vmand %vm708, %vm458
        %v1017 = vsel %vm1013, 1, 0
        %v1018 = vsel %vm1014, 1, 0
        %v1019 = vsel %vm1015, 1, 0
        %v1020 = vsel %vm1016, 1, 0
        %vm1021 = vcmp.eq.s32.totalorder %v1017, 1
        %vm1022 = vcmp.eq.s32.totalorder %v1018, 1
        %vm1023 = vcmp.eq.s32.totalorder %v1019, 1
        %vm1024 = vcmp.eq.s32.totalorder %v1020, 1
        %v1025 = vsel %vm1021, %v1011, 0.0
        %v1026 = vsel %vm1022, %v1010, 0.0
        %v1027 = vsel %vm1023, %v1009, 0.0
        %v1028 = vsel %vm1024, %v1012, 0.0
        %v1033 = vrot.slane %v1025, 4
        %v1034 = vrot.slane %v1026, 4
        %v1035 = vrot.slane %v1027, 4
        %v1036 = vrot.slane %v1028, 4
        %1041 = vst [vmem:[#allocation2 + $0xe0] sm:$0xf0] %v1033
        %1042 = vst [vmem:[#allocation2 + $0xe8] sm:$0xf0] %v1034
        %1043 = vst [vmem:[#allocation2 + $0xf0] sm:$0xf0] %v1035
        %1044 = vst [vmem:[#allocation2 + $0xf8] sm:$0xf0] %v1036
        %1045 = vrot.lane.b32.xlu0 %v351, 120
        %v1046 = vpop.permute.xlu0 %1045
        %1047 = vrot.lane.b32.xlu0 %v364, 120
        %v1048 = vpop.permute.xlu0 %1047
        %1049 = vrot.lane.b32.xlu0 %v377, 120
        %v1050 = vpop.permute.xlu0 %1049
        %1051 = vrot.lane.b32.xlu0 %v390, 120
        %v1052 = vpop.permute.xlu0 %1051
        %vm1053 = vcmp.lt.s32.totalorder %v394, 120
        %v1054 = vsel %vm1053, %v1050, %v1052
        %v1055 = vsel %vm1053, %v1048, %v1050
        %v1056 = vsel %vm1053, %v1046, %v1048
        %v1057 = vsel %vm1053, %v1052, %v1046
        %v1058 = vsel %vm705, 1, 0
        %v1059 = vsel %vm706, 1, 0
        %v1060 = vsel %vm707, 1, 0
        %v1061 = vsel %vm708, 1, 0
        %vm1062 = vcmp.eq.s32.totalorder %v1058, 1
        %vm1063 = vcmp.eq.s32.totalorder %v1059, 1
        %vm1064 = vcmp.eq.s32.totalorder %v1060, 1
        %vm1065 = vcmp.eq.s32.totalorder %v1061, 1
        %v1066 = vsel %vm1062, %v1056, 0.0
        %v1067 = vsel %vm1063, %v1055, 0.0
        %v1068 = vsel %vm1064, %v1054, 0.0
        %v1069 = vsel %vm1065, %v1057, 0.0
        %1070 = vst [vmem:[#allocation2 + $0x100] sm:$0xf] %v1066
        %1071 = vst [vmem:[#allocation2 + $0x108] sm:$0xf] %v1067
        %1072 = vst [vmem:[#allocation2 + $0x110] sm:$0xf] %v1068
        %1073 = vst [vmem:[#allocation2 + $0x118] sm:$0xf] %v1069
        %1074 = vrot.lane.b32.xlu0 %v351, 119
        %v1075 = vpop.permute.xlu0 %1074
        %1076 = vrot.lane.b32.xlu0 %v364, 119
        %v1077 = vpop.permute.xlu0 %1076
        %1078 = vrot.lane.b32.xlu0 %v377, 119
        %v1079 = vpop.permute.xlu0 %1078
        %1080 = vrot.lane.b32.xlu0 %v390, 119
        %v1081 = vpop.permute.xlu0 %1080
        %vm1082 = vcmp.lt.s32.totalorder %v394, 119
        %v1083 = vsel %vm1082, %v1079, %v1081
        %v1084 = vsel %vm1082, %v1077, %v1079
        %v1085 = vsel %vm1082, %v1075, %v1077
        %v1086 = vsel %vm1082, %v1081, %v1075
        %vm1087 = vmand %vm705, %vm541
        %vm1088 = vmand %vm706, %vm542
        %vm1089 = vmand %vm707, %vm543
        %vm1090 = vmand %vm708, %vm544
        %v1091 = vsel %vm1087, 1, 0
        %v1092 = vsel %vm1088, 1, 0
        %v1093 = vsel %vm1089, 1, 0
        %v1094 = vsel %vm1090, 1, 0
        %vm1095 = vcmp.eq.s32.totalorder %v1091, 1
        %vm1096 = vcmp.eq.s32.totalorder %v1092, 1
        %vm1097 = vcmp.eq.s32.totalorder %v1093, 1
        %vm1098 = vcmp.eq.s32.totalorder %v1094, 1
        %v1099 = vsel %vm1095, %v1085, 0.0
        %v1100 = vsel %vm1096, %v1084, 0.0
        %v1101 = vsel %vm1097, %v1083, 0.0
        %v1102 = vsel %vm1098, %v1086, 0.0
        %v1107 = vrot.slane %v1099, 4
        %v1108 = vrot.slane %v1100, 4
        %v1109 = vrot.slane %v1101, 4
        %v1110 = vrot.slane %v1102, 4
        %1115 = vst [vmem:[#allocation2 + $0x100] sm:$0xf0] %v1107
        %1116 = vst [vmem:[#allocation2 + $0x108] sm:$0xf0] %v1108
        %1117 = vst [vmem:[#allocation2 + $0x110] sm:$0xf0] %v1109
        %1118 = vst [vmem:[#allocation2 + $0x118] sm:$0xf0] %v1110
        %vm1119 = vcmp.ge.s32.totalorder %v394, 0
        %vm1120 = vcmp.ge.s32.totalorder %v395, 0
        %vm1121 = vcmp.ge.s32.totalorder %v396, 0
        %vm1122 = vcmp.ge.s32.totalorder %v397, 0
        %vm1123 = vcmp.lt.s32.totalorder %v394, 448
        %vm1124 = vcmp.lt.s32.totalorder %v395, 448
        %vm1125 = vcmp.lt.s32.totalorder %v396, 448
        %vm1126 = vcmp.lt.s32.totalorder %v397, 448
        %vm1127 = vmand %vm1119, %vm1123
        %vm1128 = vmand %vm1120, %vm1124
        %vm1129 = vmand %vm1121, %vm1125
        %vm1130 = vmand %vm1122, %vm1126
        %vm1131 = vmand %vm1127, %vm439
        %vm1132 = vmand %vm1128, %vm440
        %vm1133 = vmand %vm1129, %vm441
        %vm1134 = vmand %vm1130, %vm442
        %vm1135 = vmand %vm1131, %vm455
        %vm1136 = vmand %vm1132, %vm456
        %vm1137 = vmand %vm1133, %vm457
        %vm1138 = vmand %vm1134, %vm458
        %v1139 = vsel %vm1135, 1, 0
        %v1140 = vsel %vm1136, 1, 0
        %v1141 = vsel %vm1137, 1, 0
        %v1142 = vsel %vm1138, 1, 0
        %vm1143 = vcmp.eq.s32.totalorder %v1139, 1
        %vm1144 = vcmp.eq.s32.totalorder %v1140, 1
        %vm1145 = vcmp.eq.s32.totalorder %v1141, 1
        %vm1146 = vcmp.eq.s32.totalorder %v1142, 1
        %v1147 = vsel %vm1143, %v417, 0.0
        %v1148 = vsel %vm1144, %v416, 0.0
        %v1149 = vsel %vm1145, %v415, 0.0
        %v1150 = vsel %vm1146, %v418, 0.0
        %1151 = vst [vmem:[#allocation2 + $0x120] sm:$0xf] %v1147
        %1152 = vst [vmem:[#allocation2 + $0x128] sm:$0xf] %v1148
        %1153 = vst [vmem:[#allocation2 + $0x130] sm:$0xf] %v1149
        %1154 = vst [vmem:[#allocation2 + $0x138] sm:$0xf] %v1150
        %v1155 = vsel %vm1131, 1, 0
        %v1156 = vsel %vm1132, 1, 0
        %v1157 = vsel %vm1133, 1, 0
        %v1158 = vsel %vm1134, 1, 0
        %vm1159 = vcmp.eq.s32.totalorder %v1155, 1
        %vm1160 = vcmp.eq.s32.totalorder %v1156, 1
        %vm1161 = vcmp.eq.s32.totalorder %v1157, 1
        %vm1162 = vcmp.eq.s32.totalorder %v1158, 1
        %v1163 = vsel %vm1159, %v490, 0.0
        %v1164 = vsel %vm1160, %v489, 0.0
        %v1165 = vsel %vm1161, %v488, 0.0
        %v1166 = vsel %vm1162, %v491, 0.0
        %v1171 = vrot.slane %v1163, 4
        %v1172 = vrot.slane %v1164, 4
        %v1173 = vrot.slane %v1165, 4
        %v1174 = vrot.slane %v1166, 4
        %1179 = vst [vmem:[#allocation2 + $0x120] sm:$0xf0] %v1171
        %1180 = vst [vmem:[#allocation2 + $0x128] sm:$0xf0] %v1172
        %1181 = vst [vmem:[#allocation2 + $0x130] sm:$0xf0] %v1173
        %1182 = vst [vmem:[#allocation2 + $0x138] sm:$0xf0] %v1174
        %vm1183 = vmand %vm1131, %vm541
        %vm1184 = vmand %vm1132, %vm542
        %vm1185 = vmand %vm1133, %vm543
        %vm1186 = vmand %vm1134, %vm544
        %v1187 = vsel %vm1183, 1, 0
        %v1188 = vsel %vm1184, 1, 0
        %v1189 = vsel %vm1185, 1, 0
        %v1190 = vsel %vm1186, 1, 0
        %vm1191 = vcmp.eq.s32.totalorder %v1187, 1
        %vm1192 = vcmp.eq.s32.totalorder %v1188, 1
        %vm1193 = vcmp.eq.s32.totalorder %v1189, 1
        %vm1194 = vcmp.eq.s32.totalorder %v1190, 1
        %v1195 = vsel %vm1191, %v531, 0.0
        %v1196 = vsel %vm1192, %v530, 0.0
        %v1197 = vsel %vm1193, %v529, 0.0
        %v1198 = vsel %vm1194, %v532, 0.0
        %1199 = vst [vmem:[#allocation2 + $0x140] sm:$0xf] %v1195
        %1200 = vst [vmem:[#allocation2 + $0x148] sm:$0xf] %v1196
        %1201 = vst [vmem:[#allocation2 + $0x150] sm:$0xf] %v1197
        %1202 = vst [vmem:[#allocation2 + $0x158] sm:$0xf] %v1198
        %vm1203 = vmand %vm1127, %vm455
        %vm1204 = vmand %vm1128, %vm456
        %vm1205 = vmand %vm1129, %vm457
        %vm1206 = vmand %vm1130, %vm458
        %v1207 = vsel %vm1203, 1, 0
        %v1208 = vsel %vm1204, 1, 0
        %v1209 = vsel %vm1205, 1, 0
        %v1210 = vsel %vm1206, 1, 0
        %vm1211 = vcmp.eq.s32.totalorder %v1207, 1
        %vm1212 = vcmp.eq.s32.totalorder %v1208, 1
        %vm1213 = vcmp.eq.s32.totalorder %v1209, 1
        %vm1214 = vcmp.eq.s32.totalorder %v1210, 1
        %v1215 = vsel %vm1211, %v576, 0.0
        %v1216 = vsel %vm1212, %v575, 0.0
        %v1217 = vsel %vm1213, %v574, 0.0
        %v1218 = vsel %vm1214, %v577, 0.0
        %v1223 = vrot.slane %v1215, 4
        %v1224 = vrot.slane %v1216, 4
        %v1225 = vrot.slane %v1217, 4
        %v1226 = vrot.slane %v1218, 4
        %1231 = vst [vmem:[#allocation2 + $0x140] sm:$0xf0] %v1223
        %1232 = vst [vmem:[#allocation2 + $0x148] sm:$0xf0] %v1224
        %1233 = vst [vmem:[#allocation2 + $0x150] sm:$0xf0] %v1225
        %1234 = vst [vmem:[#allocation2 + $0x158] sm:$0xf0] %v1226
        %v1235 = vsel %vm1127, 1, 0
        %v1236 = vsel %vm1128, 1, 0
        %v1237 = vsel %vm1129, 1, 0
        %v1238 = vsel %vm1130, 1, 0
        %vm1239 = vcmp.eq.s32.totalorder %v1235, 1
        %vm1240 = vcmp.eq.s32.totalorder %v1236, 1
        %vm1241 = vcmp.eq.s32.totalorder %v1237, 1
        %vm1242 = vcmp.eq.s32.totalorder %v1238, 1
        %v1243 = vsel %vm1239, %v621, 0.0
        %v1244 = vsel %vm1240, %v620, 0.0
        %v1245 = vsel %vm1241, %v619, 0.0
        %v1246 = vsel %vm1242, %v622, 0.0
        %1247 = vst [vmem:[#allocation2 + $0x160] sm:$0xf] %v1243
        %1248 = vst [vmem:[#allocation2 + $0x168] sm:$0xf] %v1244
        %1249 = vst [vmem:[#allocation2 + $0x170] sm:$0xf] %v1245
        %1250 = vst [vmem:[#allocation2 + $0x178] sm:$0xf] %v1246
        %vm1251 = vmand %vm1127, %vm541
        %vm1252 = vmand %vm1128, %vm542
        %vm1253 = vmand %vm1129, %vm543
        %vm1254 = vmand %vm1130, %vm544
        %v1255 = vsel %vm1251, 1, 0
        %v1256 = vsel %vm1252, 1, 0
        %v1257 = vsel %vm1253, 1, 0
        %v1258 = vsel %vm1254, 1, 0
        %vm1259 = vcmp.eq.s32.totalorder %v1255, 1
        %vm1260 = vcmp.eq.s32.totalorder %v1256, 1
        %vm1261 = vcmp.eq.s32.totalorder %v1257, 1
        %vm1262 = vcmp.eq.s32.totalorder %v1258, 1
        %v1263 = vsel %vm1259, %v650, 0.0
        %v1264 = vsel %vm1260, %v649, 0.0
        %v1265 = vsel %vm1261, %v648, 0.0
        %v1266 = vsel %vm1262, %v651, 0.0
        %v1271 = vrot.slane %v1263, 4
        %v1272 = vrot.slane %v1264, 4
        %v1273 = vrot.slane %v1265, 4
        %v1274 = vrot.slane %v1266, 4
        %1279 = vst [vmem:[#allocation2 + $0x160] sm:$0xf0] %v1271
        %1280 = vst [vmem:[#allocation2 + $0x168] sm:$0xf0] %v1272
        %1281 = vst [vmem:[#allocation2 + $0x170] sm:$0xf0] %v1273
        %1282 = vst [vmem:[#allocation2 + $0x178] sm:$0xf0] %v1274
        %vm1283 = vmand %vm1127, %vm705
        %vm1284 = vmand %vm1128, %vm706
        %vm1285 = vmand %vm1129, %vm707
        %vm1286 = vmand %vm1130, %vm708
        %vm1287 = vmand %vm1283, %vm455
        %vm1288 = vmand %vm1284, %vm456
        %vm1289 = vmand %vm1285, %vm457
        %vm1290 = vmand %vm1286, %vm458
        %v1291 = vsel %vm1287, 1, 0
        %v1292 = vsel %vm1288, 1, 0
        %v1293 = vsel %vm1289, 1, 0
        %v1294 = vsel %vm1290, 1, 0
        %vm1295 = vcmp.eq.s32.totalorder %v1291, 1
        %vm1296 = vcmp.eq.s32.totalorder %v1292, 1
        %vm1297 = vcmp.eq.s32.totalorder %v1293, 1
        %vm1298 = vcmp.eq.s32.totalorder %v1294, 1
        %v1299 = vsel %vm1295, %v695, 0.0
        %v1300 = vsel %vm1296, %v694, 0.0
        %v1301 = vsel %vm1297, %v693, 0.0
        %v1302 = vsel %vm1298, %v696, 0.0
        %1303 = vst [vmem:[#allocation2 + $0x180] sm:$0xf] %v1299
        %1304 = vst [vmem:[#allocation2 + $0x188] sm:$0xf] %v1300
        %1305 = vst [vmem:[#allocation2 + $0x190] sm:$0xf] %v1301
        %1306 = vst [vmem:[#allocation2 + $0x198] sm:$0xf] %v1302
        %v1307 = vsel %vm1283, 1, 0
        %v1308 = vsel %vm1284, 1, 0
        %v1309 = vsel %vm1285, 1, 0
        %v1310 = vsel %vm1286, 1, 0
        %vm1311 = vcmp.eq.s32.totalorder %v1307, 1
        %vm1312 = vcmp.eq.s32.totalorder %v1308, 1
        %vm1313 = vcmp.eq.s32.totalorder %v1309, 1
        %vm1314 = vcmp.eq.s32.totalorder %v1310, 1
        %v1315 = vsel %vm1311, %v744, 0.0
        %v1316 = vsel %vm1312, %v743, 0.0
        %v1317 = vsel %vm1313, %v742, 0.0
        %v1318 = vsel %vm1314, %v745, 0.0
        %v1323 = vrot.slane %v1315, 4
        %v1324 = vrot.slane %v1316, 4
        %v1325 = vrot.slane %v1317, 4
        %v1326 = vrot.slane %v1318, 4
        %1331 = vst [vmem:[#allocation2 + $0x180] sm:$0xf0] %v1323
        %1332 = vst [vmem:[#allocation2 + $0x188] sm:$0xf0] %v1324
        %1333 = vst [vmem:[#allocation2 + $0x190] sm:$0xf0] %v1325
        %1334 = vst [vmem:[#allocation2 + $0x198] sm:$0xf0] %v1326
        %vm1335 = vmand %vm1283, %vm541
        %vm1336 = vmand %vm1284, %vm542
        %vm1337 = vmand %vm1285, %vm543
        %vm1338 = vmand %vm1286, %vm544
        %v1339 = vsel %vm1335, 1, 0
        %v1340 = vsel %vm1336, 1, 0
        %v1341 = vsel %vm1337, 1, 0
        %v1342 = vsel %vm1338, 1, 0
        %vm1343 = vcmp.eq.s32.totalorder %v1339, 1
        %vm1344 = vcmp.eq.s32.totalorder %v1340, 1
        %vm1345 = vcmp.eq.s32.totalorder %v1341, 1
        %vm1346 = vcmp.eq.s32.totalorder %v1342, 1
        %v1347 = vsel %vm1343, %v785, 0.0
        %v1348 = vsel %vm1344, %v784, 0.0
        %v1349 = vsel %vm1345, %v783, 0.0
        %v1350 = vsel %vm1346, %v786, 0.0
        %1351 = vst [vmem:[#allocation2 + $0x1a0] sm:$0xf] %v1347
        %1352 = vst [vmem:[#allocation2 + $0x1a8] sm:$0xf] %v1348
        %1353 = vst [vmem:[#allocation2 + $0x1b0] sm:$0xf] %v1349
        %1354 = vst [vmem:[#allocation2 + $0x1b8] sm:$0xf] %v1350
        %v1355 = vld [vmem:[#allocation2] sm:$0xff]
        %v1356 = vld [vmem:[#allocation2 + $0x8] sm:$0xff]
        %v1357 = vld [vmem:[#allocation2 + $0x10] sm:$0xff]
        %v1358 = vld [vmem:[#allocation2 + $0x18] sm:$0xff]
        %v1359 = vld [vmem:[#allocation2 + $0x20] sm:$0xff]
        %v1360 = vld [vmem:[#allocation2 + $0x28] sm:$0xff]
        %v1361 = vld [vmem:[#allocation2 + $0x30] sm:$0xff]
        %v1362 = vld [vmem:[#allocation2 + $0x38] sm:$0xff]
        %v1363 = vld [vmem:[#allocation2 + $0x40] sm:$0xff]
        %v1364 = vld [vmem:[#allocation2 + $0x48] sm:$0xff]
        %v1365 = vld [vmem:[#allocation2 + $0x50] sm:$0xff]
        %v1366 = vld [vmem:[#allocation2 + $0x58] sm:$0xff]
        %v1367 = vld [vmem:[#allocation2 + $0x60] sm:$0xff]
        %v1368 = vld [vmem:[#allocation2 + $0x68] sm:$0xff]
        %v1369 = vld [vmem:[#allocation2 + $0x70] sm:$0xff]
        %v1370 = vld [vmem:[#allocation2 + $0x78] sm:$0xff]
        %v1371 = vld [vmem:[#allocation2 + $0x80] sm:$0xff]
        %v1372 = vld [vmem:[#allocation2 + $0x88] sm:$0xff]
        %v1373 = vld [vmem:[#allocation2 + $0x90] sm:$0xff]
        %v1374 = vld [vmem:[#allocation2 + $0x98] sm:$0xff]
        %v1375 = vld [vmem:[#allocation2 + $0xa0] sm:$0xff]
        %v1376 = vld [vmem:[#allocation2 + $0xa8] sm:$0xff]
        %v1377 = vld [vmem:[#allocation2 + $0xb0] sm:$0xff]
        %v1378 = vld [vmem:[#allocation2 + $0xb8] sm:$0xff]
        %v1379 = vld [vmem:[#allocation2 + $0xc0] sm:$0xff]
        %v1380 = vld [vmem:[#allocation2 + $0xc8] sm:$0xff]
        %v1381 = vld [vmem:[#allocation2 + $0xd0] sm:$0xff]
        %v1382 = vld [vmem:[#allocation2 + $0xd8] sm:$0xff]
        %v1383 = vld [vmem:[#allocation2 + $0xe0] sm:$0xff]
        %v1384 = vld [vmem:[#allocation2 + $0xe8] sm:$0xff]
        %v1385 = vld [vmem:[#allocation2 + $0xf0] sm:$0xff]
        %v1386 = vld [vmem:[#allocation2 + $0xf8] sm:$0xff]
        %v1387 = vld [vmem:[#allocation2 + $0x100] sm:$0xff]
        %v1388 = vld [vmem:[#allocation2 + $0x108] sm:$0xff]
        %v1389 = vld [vmem:[#allocation2 + $0x110] sm:$0xff]
        %v1390 = vld [vmem:[#allocation2 + $0x118] sm:$0xff]
        %v1391 = vld [vmem:[#allocation2 + $0x120] sm:$0xff]
        %v1392 = vld [vmem:[#allocation2 + $0x128] sm:$0xff]
        %v1393 = vld [vmem:[#allocation2 + $0x130] sm:$0xff]
        %v1394 = vld [vmem:[#allocation2 + $0x138] sm:$0xff]
        %v1395 = vld [vmem:[#allocation2 + $0x140] sm:$0xff]
        %v1396 = vld [vmem:[#allocation2 + $0x148] sm:$0xff]
        %v1397 = vld [vmem:[#allocation2 + $0x150] sm:$0xff]
        %v1398 = vld [vmem:[#allocation2 + $0x158] sm:$0xff]
        %v1399 = vld [vmem:[#allocation2 + $0x160] sm:$0xff]
        %v1400 = vld [vmem:[#allocation2 + $0x168] sm:$0xff]
        %v1401 = vld [vmem:[#allocation2 + $0x170] sm:$0xff]
        %v1402 = vld [vmem:[#allocation2 + $0x178] sm:$0xff]
        %v1403 = vld [vmem:[#allocation2 + $0x180] sm:$0xff]
        %v1404 = vld [vmem:[#allocation2 + $0x188] sm:$0xff]
        %v1405 = vld [vmem:[#allocation2 + $0x190] sm:$0xff]
        %v1406 = vld [vmem:[#allocation2 + $0x198] sm:$0xff]
        %v1407 = vld [vmem:[#allocation2 + $0x1a0] sm:$0xf]
        %v1408 = vld [vmem:[#allocation2 + $0x1a8] sm:$0xf]
        %v1409 = vld [vmem:[#allocation2 + $0x1b0] sm:$0xf]
        %v1410 = vld [vmem:[#allocation2 + $0x1b8] sm:$0xf]
        %v1411 = vpack.c.bf16 %v1359, %v1355
        %v1412 = vpack.c.bf16 %v1360, %v1356
        %v1413 = vpack.c.bf16 %v1361, %v1357
        %v1414 = vpack.c.bf16 %v1362, %v1358
        %v1415 = vpack.c.bf16 %v1367, %v1363
        %v1416 = vpack.c.bf16 %v1368, %v1364
        %v1417 = vpack.c.bf16 %v1369, %v1365
        %v1418 = vpack.c.bf16 %v1370, %v1366
        %v1419 = vpack.c.bf16 %v1375, %v1371
        %v1420 = vpack.c.bf16 %v1376, %v1372
        %v1421 = vpack.c.bf16 %v1377, %v1373
        %v1422 = vpack.c.bf16 %v1378, %v1374
        %v1423 = vpack.c.bf16 %v1383, %v1379
        %v1424 = vpack.c.bf16 %v1384, %v1380
        %v1425 = vpack.c.bf16 %v1385, %v1381
        %v1426 = vpack.c.bf16 %v1386, %v1382
        %v1427 = vpack.c.bf16 %v1391, %v1387
        %v1428 = vpack.c.bf16 %v1392, %v1388
        %v1429 = vpack.c.bf16 %v1393, %v1389
        %v1430 = vpack.c.bf16 %v1394, %v1390
        %v1431 = vpack.c.bf16 %v1399, %v1395
        %v1432 = vpack.c.bf16 %v1400, %v1396
        %v1433 = vpack.c.bf16 %v1401, %v1397
        %v1434 = vpack.c.bf16 %v1402, %v1398
        %v1435 = vpack.c.bf16 %v1407, %v1403
        %v1436 = vpack.c.bf16 %v1408, %v1404
        %v1437 = vpack.c.bf16 %v1409, %v1405
        %v1438 = vpack.c.bf16 %v1410, %v1406
        %v1439 = vld [vmem:[%s3] sm:$0x3]
        %v1440 = vld [vmem:[%s4] sm:$0xf]
        %1442 = vset.pattern.permute.xlu0 0
        %1443 = vperm.xlu0 %1442, %v1440
        %v1444 = vpop.permute.xlu0 %1443
        %vm1446 = vcmask 883712
        %v1448 = vsel %vm1446, %v1439, 0
        %vm1450 = vcmask 1045504
        %v1452 = vsel %vm1450, %v1435, 0
        %v1455 = vsel %vm1450, %v1436, 0
        %v1458 = vsel %vm1450, %v1437, 0
        %v1461 = vsel %vm1450, %v1438, 0
        %1463 = vmatpush.bf16.msra.mxu0 0
        %1464 = vmatpush.bf16.msra.mxu0 %v1452
        %1465 = vmatpush.bf16.msra.mxu0 %v1431
        %1466 = vmatpush.bf16.msra.mxu0 %v1427
        %1467 = vmatpush.bf16.msra.mxu0 %v1423
        %1468 = vmatpush.bf16.msra.mxu0 %v1419
        %1469 = vmatpush.bf16.msra.mxu0 %v1415
        %1470 = vmatpush.bf16.msra.mxu0 %v1411
        %1471 = vmatmul.bf16.gmra.mxu0 %v1448
        %v1472 = vpop.f32.mrf.mxu0
        %v1473 = vadd.f32 %v1444, %v1472
        %v1474 = vpop.f32.mrf.mxu0
        %1475 = vdwg.mxu0
        %1476 = vmatpush.bf16.msra.mxu0 0
        %1477 = vmatpush.bf16.msra.mxu0 %v1455
        %1478 = vmatpush.bf16.msra.mxu0 %v1432
        %1479 = vmatpush.bf16.msra.mxu0 %v1428
        %1480 = vmatpush.bf16.msra.mxu0 %v1424
        %1481 = vmatpush.bf16.msra.mxu0 %v1420
        %1482 = vmatpush.bf16.msra.mxu0 %v1416
        %1483 = vmatpush.bf16.msra.mxu0 %v1412
        %1484 = vmatmul.bf16.gmra.mxu0 %v1448
        %v1485 = vpop.f32.mrf.mxu0
        %v1486 = vadd.f32 %v1444, %v1485
        %v1487 = vpop.f32.mrf.mxu0
        %1488 = vdwg.mxu0
        %1489 = vmatpush.bf16.msra.mxu0 0
        %1490 = vmatpush.bf16.msra.mxu0 %v1458
        %1491 = vmatpush.bf16.msra.mxu0 %v1433
        %1492 = vmatpush.bf16.msra.mxu0 %v1429
        %1493 = vmatpush.bf16.msra.mxu0 %v1425
        %1494 = vmatpush.bf16.msra.mxu0 %v1421
        %1495 = vmatpush.bf16.msra.mxu0 %v1417
        %1496 = vmatpush.bf16.msra.mxu0 %v1413
        %1497 = vmatmul.bf16.gmra.mxu0 %v1448
        %v1498 = vpop.f32.mrf.mxu0
        %v1499 = vadd.f32 %v1444, %v1498
        %v1500 = vpop.f32.mrf.mxu0
        %1501 = vdwg.mxu0
        %1502 = vmatpush.bf16.msra.mxu0 0
        %1503 = vmatpush.bf16.msra.mxu0 %v1461
        %1504 = vmatpush.bf16.msra.mxu0 %v1434
        %1505 = vmatpush.bf16.msra.mxu0 %v1430
        %1506 = vmatpush.bf16.msra.mxu0 %v1426
        %1507 = vmatpush.bf16.msra.mxu0 %v1422
        %1508 = vmatpush.bf16.msra.mxu0 %v1418
        %1509 = vmatpush.bf16.msra.mxu0 %v1414
        %1510 = vmatmul.bf16.gmra.mxu0 %v1448
        %v1511 = vpop.f32.mrf.mxu0
        %v1512 = vadd.f32 %v1444, %v1511
        %v1513 = vpop.f32.mrf.mxu0
        %1514 = vdwg.mxu0
        %v1515 = vld [vmem:[%s5] sm:$0x3]
        %v1516 = vpack.c.bf16 %v1473, %v1473
        %v1517 = vpack.c.bf16 %v1486, %v1486
        %v1518 = vpack.c.bf16 %v1499, %v1499
        %v1519 = vpack.c.bf16 %v1512, %v1512
        %v1520 = vld [vmem:[%s6] sm:$0xf]
        %1522 = vset.pattern.permute.xlu0 0
        %1523 = vperm.xlu0 %1522, %v1520
        %v1524 = vpop.permute.xlu0 %1523
        %v1527 = vsel %vm324, %v1515, 0
        %v1530 = vsel %vm328, %v1516, 0
        %v1533 = vsel %vm328, %v1517, 0
        %v1536 = vsel %vm328, %v1518, 0
        %v1539 = vsel %vm328, %v1519, 0
        %1541 = vmatpush.bf16.msra.mxu0 0
        %1542 = vmatpush.bf16.msra.mxu0 0
        %1543 = vmatpush.bf16.msra.mxu0 0
        %1544 = vmatpush.bf16.msra.mxu0 0
        %1545 = vmatpush.bf16.msra.mxu0 0
        %1546 = vmatpush.bf16.msra.mxu0 0
        %1547 = vmatpush.bf16.msra.mxu0 0
        %1548 = vmatpush.bf16.msra.mxu0 %v1530
        %1549 = vmatmul.bf16.gmra.mxu0 %v1527
        %v1550 = vpop.f32.mrf.mxu0
        %v1551 = vadd.f32 %v1524, %v1550
        %v1552 = vpop.f32.mrf.mxu0
        %1553 = vdwg.mxu0
        %1554 = vmatpush.bf16.msra.mxu0 0
        %1555 = vmatpush.bf16.msra.mxu0 0
        %1556 = vmatpush.bf16.msra.mxu0 0
        %1557 = vmatpush.bf16.msra.mxu0 0
        %1558 = vmatpush.bf16.msra.mxu0 0
        %1559 = vmatpush.bf16.msra.mxu0 0
        %1560 = vmatpush.bf16.msra.mxu0 0
        %1561 = vmatpush.bf16.msra.mxu0 %v1533
        %1562 = vmatmul.bf16.gmra.mxu0 %v1527
        %v1563 = vpop.f32.mrf.mxu0
        %v1564 = vadd.f32 %v1524, %v1563
        %v1565 = vpop.f32.mrf.mxu0
        %1566 = vdwg.mxu0
        %1567 = vmatpush.bf16.msra.mxu0 0
        %1568 = vmatpush.bf16.msra.mxu0 0
        %1569 = vmatpush.bf16.msra.mxu0 0
        %1570 = vmatpush.bf16.msra.mxu0 0
        %1571 = vmatpush.bf16.msra.mxu0 0
        %1572 = vmatpush.bf16.msra.mxu0 0
        %1573 = vmatpush.bf16.msra.mxu0 0
        %1574 = vmatpush.bf16.msra.mxu0 %v1536
        %1575 = vmatmul.bf16.gmra.mxu0 %v1527
        %v1576 = vpop.f32.mrf.mxu0
        %v1577 = vadd.f32 %v1524, %v1576
        %v1578 = vpop.f32.mrf.mxu0
        %1579 = vdwg.mxu0
        %1580 = vmatpush.bf16.msra.mxu0 0
        %1581 = vmatpush.bf16.msra.mxu0 0
        %1582 = vmatpush.bf16.msra.mxu0 0
        %1583 = vmatpush.bf16.msra.mxu0 0
        %1584 = vmatpush.bf16.msra.mxu0 0
        %1585 = vmatpush.bf16.msra.mxu0 0
        %1586 = vmatpush.bf16.msra.mxu0 0
        %1587 = vmatpush.bf16.msra.mxu0 %v1539
        %1588 = vmatmul.bf16.gmra.mxu0 %v1527
        %v1589 = vpop.f32.mrf.mxu0
        %v1590 = vadd.f32 %v1524, %v1589
        %v1591 = vpop.f32.mrf.mxu0
        %1592 = vdwg.mxu0
        %1593 = vst [vmem:[#allocation1] ss:$2 sm:$0xff] %v298
        %s1594 = scalar_lea.vmem [#allocation1], 16
        %1595 = vst [vmem:[%s1594] ss:$2 sm:$0xff] %v299
        %v1596 = vld.sshfl [vmem:[#allocation1] sm:$0xff pattern:$0x75316420]
        %v1597 = vld.sshfl [vmem:[#allocation1 + $0x8] sm:$0xff pattern:$0x75316420]
        %v1598 = vld.sshfl [vmem:[#allocation1 + $0x10] sm:$0xff pattern:$0x75316420]
        %v1599 = vld.sshfl [vmem:[#allocation1 + $0x18] sm:$0xff pattern:$0x75316420]
        %v1604 = vadd.f32 %v1551, %v1596
        %v1605 = vadd.f32 %v1564, %v1597
        %v1606 = vadd.f32 %v1577, %v1598
        %v1607 = vadd.f32 %v1590, %v1599
        %v1612 = vrot.slane %v1605, 4
        %v1613 = vrot.slane %v1607, 4
        %vm1614 = vcmask 1043456
        %v1615 = vsel %vm1614, %v1604, %v1612
        %v1616 = vsel %vm1614, %v1606, %v1613
        %1619 = vst [vmem:[%s296] sm:$0xff] %v1615
        %1620 = vst [vmem:[%s296 + $0x8] sm:$0xff] %v1616
        %s1621 = sand.u32 %s184, 1
        %s1622 = scalar_lea.sflag [#allocation5], %s1621
        %s1623 = sand.u32 %s184, 1
        %s1624 = smul.addr %s1623, 16
        %s1625 = scalar_lea.vmem [#allocation6], %s1624
        // Predicated region
        $region53: #{tpu_custom_call.1} parent=47 // pred_check
          %p1626 = pneg %p194
        $region54: #{tpu_custom_call.1} parent=47 // pred_check_branch
          %1628 = sbr.rel (%p1626) target = $region56
        $region55: #{tpu_custom_call.1} parent=47 // pred_region
          %1630 = vsyncadd %s1622, 0
          %s1631 = smul.addr %s24, 4
          %s1632 = smul.addr %s1631, 4
          %s1633 = scalar_lea.hbm %s7, %s1632
          %s1635 = sshll.u32 %s1625, 4
          %s1636 = int_to_ptr.vmem [resolvable:$true] %s1635
          %s1637 = sshll.u32 %s1633, 4
          %s1638 = int_to_ptr.hbm [resolvable:$true] %s1637
          %1640 = dma.vmem_to_hbm [thread:$0]  %s1636, 256, %s1638, %s1622
        $region56: #{tpu_custom_call.1} parent=47 // pred_fallthru
          _
      $region48: #{tpu_custom_call.1} parent=5 // pred_fallthru
        _
      %p1641 = scmp.le.s32.totalorder 2, %s19
      // Predicated region
      $region57: #{tpu_custom_call.1} parent=5 // pred_check
        %p1642 = pneg %p1641
      $region58: #{tpu_custom_call.1} parent=5 // pred_check_branch
        %1644 = sbr.rel (%p1642) target = $region60
      $region59: #{tpu_custom_call.1} parent=5 // pred_region
        %s1645 = ssub.s32 %s19, 2
        // Predicated region
        $region61: #{tpu_custom_call.1} parent=59 // pred_check
          %p1646 = pneg %p200
        $region62: #{tpu_custom_call.1} parent=59 // pred_check_branch
          %1648 = sbr.rel (%p1646) target = $region64
        $region63: #{tpu_custom_call.1} parent=59 // pred_region
          %s1649 = sand.u32 %s185, 1
          %s1650 = scalar_lea.sflag [#allocation5], %s1649
          %s1651 = sand.u32 %s185, 1
          %s1652 = smul.addr %s1651, 16
          %s1653 = scalar_lea.vmem [#allocation6], %s1652
          %1655 = dma.done %s1650, 256
        $region64: #{tpu_custom_call.1} parent=59 // pred_fallthru
          _
      $region60: #{tpu_custom_call.1} parent=5 // pred_fallthru
        _
    $region6: #{tpu_custom_call.1} parent=1 // loop_footer
      %s23 = sadd.s32 1, %s19
    $region7: #{tpu_custom_call.1} parent=1 // loop_footer_branch
      %18 = sbr.rel target = $region3
    $region8: #{tpu_custom_call.1} parent=1 // loop_exit
      _
    %1656 = vsyncpa [#allocation4], 1
    %s1657 = scalar_lea.sflag [#allocation4], 1
    %1658 = vsyncpa %s1657, 1
    %1659 = vsyncpa [#allocation5], 1
    %s1660 = scalar_lea.sflag [#allocation5], 1
    %1661 = vsyncpa %s1660, 1

</llo_original>
